<compile_context>
chip_gen: v5e
topology: v5e:2x2
jax: 0.10.0
libtpu: 0.0.40
codegen_flags: <defaults>
</compile_context>

<pallas_src>
import jax
import jax.numpy as jnp
import numpy as np
from jax.experimental import pallas as pl
from jax.experimental.pallas import tpu as pltpu

_MAX_BATCH_BLOCK = 256   # samples per grid step (multiple of 16 for bf16 tiles)


def _round_up(a, m):
    return (a + m - 1) // m * m


# ----------------------------- fused Pallas kernel ------------------------------

def _fused_net_kernel(x_ref, w1_ref, w2_ref, wf_ref, b1_ref, bfc_ref, o_ref):
    """One batch block per grid step; the whole forward pass stays in VMEM.

    x_ref  : (B, 256)      raw 16x16 image pixels (bf16), row-major
    w1_ref : (256, 1024)   conv1 as dense matmul; lanes = [phase(4) x 256], each group packs
                           (pool_row*6+pool_col)*6 + out_channel
    w2_ref : (256, 512)    conv2 as dense matmul over the flattened pooled map;
                           lanes = [out_pos(4) x 128], each group packs out_channel in lanes 0:16
    wf_ref : (3, 128, 128) fc1 / fc2 / fc3 weights, [in_lane, out_lane]
    b1_ref : (1, 256)      conv1 bias replicated per pooled spatial position
    bfc_ref: (4, 128)      row 0: conv2 bias; rows 1..3: fc1/fc2/fc3 biases
    o_ref  : (B, 128)      logits in lanes 0:10 (lane-dense output)
    """
    xb = x_ref[...]                                                        # (B, 256) bf16

    # ---- conv1 (+ReLU) fused with maxpool1: one MXU matmul, phases in 256-lane slabs ----
    y1 = jnp.dot(xb, w1_ref[...], preferred_element_type=jnp.float32)     # (B, 1024) f32
    m1 = jnp.maximum(jnp.maximum(y1[:, 0:256], y1[:, 256:512]),
                     jnp.maximum(y1[:, 512:768], y1[:, 768:1024]))         # max over pool phases
    pooled1 = jnp.maximum(m1 + b1_ref[...], 0.0)                           # (B, 256) f32

    # ---- conv2 (+ReLU) fused with maxpool2: one MXU matmul, positions in 128-lane slabs ----
    y2 = jnp.dot(pooled1.astype(jnp.bfloat16), w2_ref[...],
                 preferred_element_type=jnp.float32)                       # (B, 512) f32
    m2 = jnp.maximum(jnp.maximum(y2[:, 0:128], y2[:, 128:256]),
                     jnp.maximum(y2[:, 256:384], y2[:, 384:512]))          # max over 2x2 positions
    flat = jnp.maximum(m2 + bfc_ref[0:1, :], 0.0)                          # (B, 128), 16 valid lanes

    # ---- fc1 -> ReLU -> fc2 -> ReLU -> fc3 -------------------------------------------------
    h = jnp.maximum(jnp.dot(flat.astype(jnp.bfloat16), wf_ref[0],
                            preferred_element_type=jnp.float32) + bfc_ref[1:2, :], 0.0)
    h = jnp.maximum(jnp.dot(h.astype(jnp.bfloat16), wf_ref[1],
                            preferred_element_type=jnp.float32) + bfc_ref[2:3, :], 0.0)
    o_ref[...] = jnp.dot(h.astype(jnp.bfloat16), wf_ref[2],
                         preferred_element_type=jnp.float32) + bfc_ref[3:4, :]


# ------------------------- host-side (load-time) weight packing -------------------------

def pack_params(params):
    """Repack raw PyTorch-layout weights into the kernel's lane layouts (numpy, done once)."""
    w1, b1, w2, b2, fw1, fb1, fw2, fb2, fw3, fb3 = [np.asarray(p, np.float32) for p in params]

    # conv1 as a dense (256 pixels -> 1024 lanes) matmul.
    # lane = q*256 + (ph*6+pw)*6 + c, where q = di*2+dj is the 2x2 pool phase and
    # the consumed pixel is (2*ph+di+ki, 2*pw+dj+kj).
    w1p = np.zeros((256, 1024), np.float32)
    for q in range(4):
        di, dj = q // 2, q % 2
        for ph in range(6):
            for pw in range(6):
                lane0 = q * 256 + (ph * 6 + pw) * 6
                for ki in range(5):
                    for kj in range(5):
                        py = 2 * ph + di + ki
                        px = 2 * pw + dj + kj
                        w1p[py * 16 + px, lane0:lane0 + 6] = w1[:, 0, ki, kj]

    # conv1 bias replicated over the 36 pooled spatial positions (added after the phase max).
    b1v = np.zeros((1, 256), np.float32)
    for p in range(36):
        b1v[0, p * 6:p * 6 + 6] = b1

    # conv2 as a dense (256 -> 512) matmul over the flattened pooled map.
    # K row = (py*6+px)*6 + ci (matches pooled1's lane layout), lane = pos*128 + oc.
    w2p = np.zeros((256, 512), np.float32)
    for pos in range(4):
        oy, ox = pos // 2, pos % 2
        for ki in range(5):
            for kj in range(5):
                py, px = oy + ki, ox + kj
                for ci in range(6):
                    w2p[(py * 6 + px) * 6 + ci, pos * 128:pos * 128 + 16] = w2[:, ci, ki, kj]

    # fc weights, [in_lane, out_lane], zero padded to 128x128.
    wfp = np.zeros((3, 128, 128), np.float32)
    wfp[0, :16, :120] = fw1.T
    wfp[1, :120, :84] = fw2.T
    wfp[2, :84, :10] = fw3.T

    # conv2 bias (added after the position max) + fc biases.
    bfc = np.zeros((4, 128), np.float32)
    bfc[0, :16] = b2
    bfc[1, :120] = fb1
    bfc[2, :84] = fb2
    bfc[3, :10] = fb3

    return (jnp.asarray(w1p, jnp.bfloat16), jnp.asarray(w2p, jnp.bfloat16),
            jnp.asarray(wfp, jnp.bfloat16), jnp.asarray(b1v, jnp.float32),
            jnp.asarray(bfc, jnp.float32))


# ------------------------------- pallas_call wrapper -------------------------------

def net_forward(x, packed):
    w1p, w2p, wfp, b1v, bfc = packed
    n = x.shape[0]

    # Raw image, flattened to 256 lanes, bf16 for the MXU (no im2col materialized in HBM).
    xf = x.reshape(n, 16 * 16).astype(jnp.bfloat16)

    b_block = min(_MAX_BATCH_BLOCK, _round_up(n, 16))
    n_pad = _round_up(n, b_block)
    if n_pad != n:
        xf = jnp.pad(xf, ((0, n_pad - n), (0, 0)))
    grid = (n_pad // b_block,)

    out = pl.pallas_call(
        _fused_net_kernel,
        out_shape=jax.ShapeDtypeStruct((n_pad, 128), jnp.float32),
        grid=grid,
        in_specs=[
            pl.BlockSpec((b_block, 256), lambda i: (i, 0)),        # raw images, blocked over batch
            pl.BlockSpec((256, 1024), lambda i: (0, 0)),           # conv1 weights (constant block)
            pl.BlockSpec((256, 512), lambda i: (0, 0)),            # conv2 weights (constant block)
            pl.BlockSpec((3, 128, 128), lambda i: (0, 0, 0)),      # fc weights   (constant block)
            pl.BlockSpec((1, 256), lambda i: (0, 0)),              # conv1 bias
            pl.BlockSpec((4, 128), lambda i: (0, 0)),              # conv2 + fc biases
        ],
        out_specs=pl.BlockSpec((b_block, 128), lambda i: (i, 0)),  # lane-dense logits row/sample
        compiler_params=pltpu.CompilerParams(dimension_semantics=("parallel",)),
    )(xf, w1p, w2p, wfp, b1v, bfc)

    return out[:n, :10]


# ---------------------------------- reference -------------------------------------

def net_reference(x, params):
    w1, b1, w2, b2, fw1, fb1, fw2, fb2, fw3, fb3 = params
    dn = ('NCHW', 'OIHW', 'NCHW')

    y = jax.lax.conv_general_dilated(x, w1, (1, 1), 'VALID', dimension_numbers=dn)
    y = jnp.maximum(y + b1[None, :, None, None], 0.0)
    n, c, h, w = y.shape
    y = y.reshape(n, c, h // 2, 2, w // 2, 2).max(axis=(3, 5))

    y = jax.lax.conv_general_dilated(y, w2, (1, 1), 'VALID', dimension_numbers=dn)
    y = jnp.maximum(y + b2[None, :, None, None], 0.0)
    n, c, h, w = y.shape
    y = y.reshape(n, c, h // 2, 2, w // 2, 2).max(axis=(3, 5))

    y = y.reshape(n, 16)
    y = jnp.maximum(y @ fw1.T + fb1, 0.0)
    y = jnp.maximum(y @ fw2.T + fb2, 0.0)
    return y @ fw3.T + fb3


# ------------------------------------ main -----------------------------------------

if __name__ == "__main__":
    key = jax.random.PRNGKey(0)
    ks = jax.random.split(key, 11)

    # Deterministic synthetic parameters (shapes from Net.__init__).
    params = (
        jax.random.normal(ks[0], (6, 1, 5, 5), jnp.float32) * 0.1,    # conv1.weight
        jax.random.normal(ks[1], (6,), jnp.float32) * 0.1,            # conv1.bias
        jax.random.normal(ks[2], (16, 6, 5, 5), jnp.float32) * 0.1,   # conv2.weight
        jax.random.normal(ks[3], (16,), jnp.float32) * 0.1,           # conv2.bias
        jax.random.normal(ks[4], (120, 16), jnp.float32) * 0.1,       # fc1.weight
        jax.random.normal(ks[5], (120,), jnp.float32) * 0.1,          # fc1.bias
        jax.random.normal(ks[6], (84, 120), jnp.float32) * 0.1,       # fc2.weight
        jax.random.normal(ks[7], (84,), jnp.float32) * 0.1,           # fc2.bias
        jax.random.normal(ks[8], (10, 84), jnp.float32) * 0.1,        # fc3.weight
        jax.random.normal(ks[9], (10,), jnp.float32) * 0.1,           # fc3.bias
    )

    # Input: NCHW (batch=2, 1 channel, 16x16 -> matches fc1 in_features 16*1*1).
    x = jax.random.normal(ks[10], (2, 1, 16, 16), jnp.float32)

    packed = pack_params(params)                 # one-time, host-side layout prep
    fwd = jax.jit(net_forward)
    out = jax.block_until_ready(fwd(x, packed))
    ref = jax.block_until_ready(net_reference(x, params))

    assert out.shape == (2, 10)
    # bf16 MXU inputs -> loosened tolerance (f32 accumulation, f32 elementwise).
    np.testing.assert_allclose(np.asarray(out), np.asarray(ref), rtol=2e-2, atol=2e-2)
    print("KERNEL_OK")
</pallas_src>

<mosaic_0001>
module attributes {stable_mosaic.version = 11 : i64} {
  func.func @_fused_net_kernel(%arg0: i32, %arg1: memref<16x256xbf16, #tpu.memory_space<vmem>>, %arg2: memref<256x1024xbf16, #tpu.memory_space<vmem>>, %arg3: memref<256x512xbf16, #tpu.memory_space<vmem>>, %arg4: memref<3x128x128xbf16, #tpu.memory_space<vmem>>, %arg5: memref<1x256xf32, #tpu.memory_space<vmem>>, %arg6: memref<4x128xf32, #tpu.memory_space<vmem>>, %arg7: memref<16x128xf32, #tpu.memory_space<vmem>>) attributes {dimension_semantics = [#tpu.dimension_semantics<parallel>], iteration_bounds = array<i64: 1>, scalar_prefetch = 0 : i64, scratch_operands = 0 : i64, tpu.core_type = #tpu.core_type<tc>, window_params = [{transform_indices = @transform_0, window_bounds = array<i64: 16, 256>}, {pipeline_mode = #tpu.pipeline_mode<synchronous>, transform_indices = @transform_1, window_bounds = array<i64: 256, 1024>}, {pipeline_mode = #tpu.pipeline_mode<synchronous>, transform_indices = @transform_2, window_bounds = array<i64: 256, 512>}, {pipeline_mode = #tpu.pipeline_mode<synchronous>, transform_indices = @transform_3, window_bounds = array<i64: 3, 128, 128>}, {pipeline_mode = #tpu.pipeline_mode<synchronous>, transform_indices = @transform_4, window_bounds = array<i64: 1, 256>}, {pipeline_mode = #tpu.pipeline_mode<synchronous>, transform_indices = @transform_5, window_bounds = array<i64: 4, 128>}, {transform_indices = @transform_6, window_bounds = array<i64: 16, 128>}]} {
    %c0 = arith.constant 0 : index
    %c0_0 = arith.constant 0 : index
    %0 = vector.load %arg1[%c0, %c0_0] : memref<16x256xbf16, #tpu.memory_space<vmem>>, vector<16x256xbf16>
    %c0_1 = arith.constant 0 : index
    %c0_2 = arith.constant 0 : index
    %1 = vector.load %arg2[%c0_1, %c0_2] : memref<256x1024xbf16, #tpu.memory_space<vmem>>, vector<256x1024xbf16>
    %cst = arith.constant dense<0.000000e+00> : vector<16x1024xf32>
    %2 = tpu.matmul %0, %1, %cst {dimension_numbers = #tpu.dot_dimension_numbers<[1], [0], [0], [1], [0, 0, 1, 1], [], []>} : vector<16x256xbf16>, vector<256x1024xbf16>, vector<16x1024xf32> -> vector<16x1024xf32>
    %3 = vector.extract_strided_slice %2 {offsets = [0, 0], sizes = [16, 256], strides = [1, 1]} : vector<16x1024xf32> to vector<16x256xf32>
    %4 = vector.extract_strided_slice %2 {offsets = [0, 256], sizes = [16, 256], strides = [1, 1]} : vector<16x1024xf32> to vector<16x256xf32>
    %5 = arith.maximumf %3, %4 : vector<16x256xf32>
    %6 = vector.extract_strided_slice %2 {offsets = [0, 512], sizes = [16, 256], strides = [1, 1]} : vector<16x1024xf32> to vector<16x256xf32>
    %7 = vector.extract_strided_slice %2 {offsets = [0, 768], sizes = [16, 256], strides = [1, 1]} : vector<16x1024xf32> to vector<16x256xf32>
    %8 = arith.maximumf %6, %7 : vector<16x256xf32>
    %9 = arith.maximumf %5, %8 : vector<16x256xf32>
    %c0_3 = arith.constant 0 : index
    %c0_4 = arith.constant 0 : index
    %10 = vector.load %arg5[%c0_3, %c0_4] : memref<1x256xf32, #tpu.memory_space<vmem>>, vector<1x256xf32>
    %11 = vector.broadcast %10 : vector<1x256xf32> to vector<16x256xf32>
    %12 = arith.addf %9, %11 : vector<16x256xf32>
    %cst_5 = arith.constant 0.000000e+00 : f32
    %13 = vector.broadcast %cst_5 : f32 to vector<16x256xf32>
    %14 = arith.maximumf %12, %13 : vector<16x256xf32>
    %15 = arith.truncf %14 : vector<16x256xf32> to vector<16x256xbf16>
    %c0_6 = arith.constant 0 : index
    %c0_7 = arith.constant 0 : index
    %16 = vector.load %arg3[%c0_6, %c0_7] : memref<256x512xbf16, #tpu.memory_space<vmem>>, vector<256x512xbf16>
    %cst_8 = arith.constant dense<0.000000e+00> : vector<16x512xf32>
    %17 = tpu.matmul %15, %16, %cst_8 {dimension_numbers = #tpu.dot_dimension_numbers<[1], [0], [0], [1], [0, 0, 1, 1], [], []>} : vector<16x256xbf16>, vector<256x512xbf16>, vector<16x512xf32> -> vector<16x512xf32>
    %18 = vector.extract_strided_slice %17 {offsets = [0, 0], sizes = [16, 128], strides = [1, 1]} : vector<16x512xf32> to vector<16x128xf32>
    %19 = vector.extract_strided_slice %17 {offsets = [0, 128], sizes = [16, 128], strides = [1, 1]} : vector<16x512xf32> to vector<16x128xf32>
    %20 = arith.maximumf %18, %19 : vector<16x128xf32>
    %21 = vector.extract_strided_slice %17 {offsets = [0, 256], sizes = [16, 128], strides = [1, 1]} : vector<16x512xf32> to vector<16x128xf32>
    %22 = vector.extract_strided_slice %17 {offsets = [0, 384], sizes = [16, 128], strides = [1, 1]} : vector<16x512xf32> to vector<16x128xf32>
    %23 = arith.maximumf %21, %22 : vector<16x128xf32>
    %24 = arith.maximumf %20, %23 : vector<16x128xf32>
    %c0_9 = arith.constant 0 : index
    %c0_10 = arith.constant 0 : index
    %25 = vector.load %arg6[%c0_9, %c0_10] : memref<4x128xf32, #tpu.memory_space<vmem>>, vector<1x128xf32>
    %26 = vector.broadcast %25 : vector<1x128xf32> to vector<16x128xf32>
    %27 = arith.addf %24, %26 : vector<16x128xf32>
    %cst_11 = arith.constant 0.000000e+00 : f32
    %28 = vector.broadcast %cst_11 : f32 to vector<16x128xf32>
    %29 = arith.maximumf %27, %28 : vector<16x128xf32>
    %30 = arith.truncf %29 : vector<16x128xf32> to vector<16x128xbf16>
    %c0_12 = arith.constant 0 : index
    %c0_13 = arith.constant 0 : index
    %c0_14 = arith.constant 0 : index
    %31 = vector.load %arg4[%c0_12, %c0_13, %c0_14] : memref<3x128x128xbf16, #tpu.memory_space<vmem>>, vector<1x128x128xbf16>
    %32 = vector.shape_cast %31 : vector<1x128x128xbf16> to vector<128x128xbf16>
    %cst_15 = arith.constant dense<0.000000e+00> : vector<16x128xf32>
    %33 = tpu.matmul %30, %32, %cst_15 {dimension_numbers = #tpu.dot_dimension_numbers<[1], [0], [0], [1], [0, 0, 1, 1], [], []>} : vector<16x128xbf16>, vector<128x128xbf16>, vector<16x128xf32> -> vector<16x128xf32>
    %c1 = arith.constant 1 : index
    %c0_16 = arith.constant 0 : index
    %34 = vector.load %arg6[%c1, %c0_16] : memref<4x128xf32, #tpu.memory_space<vmem>>, vector<1x128xf32>
    %35 = vector.broadcast %34 : vector<1x128xf32> to vector<16x128xf32>
    %36 = arith.addf %33, %35 : vector<16x128xf32>
    %cst_17 = arith.constant 0.000000e+00 : f32
    %37 = vector.broadcast %cst_17 : f32 to vector<16x128xf32>
    %38 = arith.maximumf %36, %37 : vector<16x128xf32>
    %39 = arith.truncf %38 : vector<16x128xf32> to vector<16x128xbf16>
    %c1_18 = arith.constant 1 : index
    %c0_19 = arith.constant 0 : index
    %c0_20 = arith.constant 0 : index
    %40 = vector.load %arg4[%c1_18, %c0_19, %c0_20] : memref<3x128x128xbf16, #tpu.memory_space<vmem>>, vector<1x128x128xbf16>
    %41 = vector.shape_cast %40 : vector<1x128x128xbf16> to vector<128x128xbf16>
    %cst_21 = arith.constant dense<0.000000e+00> : vector<16x128xf32>
    %42 = tpu.matmul %39, %41, %cst_21 {dimension_numbers = #tpu.dot_dimension_numbers<[1], [0], [0], [1], [0, 0, 1, 1], [], []>} : vector<16x128xbf16>, vector<128x128xbf16>, vector<16x128xf32> -> vector<16x128xf32>
    %c2 = arith.constant 2 : index
    %c0_22 = arith.constant 0 : index
    %43 = vector.load %arg6[%c2, %c0_22] : memref<4x128xf32, #tpu.memory_space<vmem>>, vector<1x128xf32>
    %44 = vector.broadcast %43 : vector<1x128xf32> to vector<16x128xf32>
    %45 = arith.addf %42, %44 : vector<16x128xf32>
    %cst_23 = arith.constant 0.000000e+00 : f32
    %46 = vector.broadcast %cst_23 : f32 to vector<16x128xf32>
    %47 = arith.maximumf %45, %46 : vector<16x128xf32>
    %48 = arith.truncf %47 : vector<16x128xf32> to vector<16x128xbf16>
    %c2_24 = arith.constant 2 : index
    %c0_25 = arith.constant 0 : index
    %c0_26 = arith.constant 0 : index
    %49 = vector.load %arg4[%c2_24, %c0_25, %c0_26] : memref<3x128x128xbf16, #tpu.memory_space<vmem>>, vector<1x128x128xbf16>
    %50 = vector.shape_cast %49 : vector<1x128x128xbf16> to vector<128x128xbf16>
    %cst_27 = arith.constant dense<0.000000e+00> : vector<16x128xf32>
    %51 = tpu.matmul %48, %50, %cst_27 {dimension_numbers = #tpu.dot_dimension_numbers<[1], [0], [0], [1], [0, 0, 1, 1], [], []>} : vector<16x128xbf16>, vector<128x128xbf16>, vector<16x128xf32> -> vector<16x128xf32>
    %c3 = arith.constant 3 : index
    %c0_28 = arith.constant 0 : index
    %52 = vector.load %arg6[%c3, %c0_28] : memref<4x128xf32, #tpu.memory_space<vmem>>, vector<1x128xf32>
    %53 = vector.broadcast %52 : vector<1x128xf32> to vector<16x128xf32>
    %54 = arith.addf %51, %53 : vector<16x128xf32>
    %c0_29 = arith.constant 0 : index
    %c0_30 = arith.constant 0 : index
    %55 = vector.load %arg7[%c0_29, %c0_30] : memref<16x128xf32, #tpu.memory_space<vmem>>, vector<16x128xf32>
    tpu.vector_store %arg7[%c0_29, %c0_30], %54 {strides = array<i32>} : memref<16x128xf32, #tpu.memory_space<vmem>>, vector<16x128xf32>,
    return
  }
  func.func @transform_0(%arg0: i32) -> (i32, i32) {
    %c0_i32 = arith.constant 0 : i32
    %c0_i32_0 = arith.constant 0 : i32
    return %arg0, %c0_i32 : i32, i32
  }
  func.func @transform_1(%arg0: i32) -> (i32, i32) {
    %c0_i32 = arith.constant 0 : i32
    %c0_i32_0 = arith.constant 0 : i32
    %c0_i32_1 = arith.constant 0 : i32
    return %c0_i32, %c0_i32_0 : i32, i32
  }
  func.func @transform_2(%arg0: i32) -> (i32, i32) {
    %c0_i32 = arith.constant 0 : i32
    %c0_i32_0 = arith.constant 0 : i32
    %c0_i32_1 = arith.constant 0 : i32
    return %c0_i32, %c0_i32_0 : i32, i32
  }
  func.func @transform_3(%arg0: i32) -> (i32, i32, i32) {
    %c0_i32 = arith.constant 0 : i32
    %c0_i32_0 = arith.constant 0 : i32
    %c0_i32_1 = arith.constant 0 : i32
    %c0_i32_2 = arith.constant 0 : i32
    return %c0_i32, %c0_i32_0, %c0_i32_1 : i32, i32, i32
  }
  func.func @transform_4(%arg0: i32) -> (i32, i32) {
    %c0_i32 = arith.constant 0 : i32
    %c0_i32_0 = arith.constant 0 : i32
    %c0_i32_1 = arith.constant 0 : i32
    return %c0_i32, %c0_i32_0 : i32, i32
  }
  func.func @transform_5(%arg0: i32) -> (i32, i32) {
    %c0_i32 = arith.constant 0 : i32
    %c0_i32_0 = arith.constant 0 : i32
    %c0_i32_1 = arith.constant 0 : i32
    return %c0_i32, %c0_i32_0 : i32, i32
  }
  func.func @transform_6(%arg0: i32) -> (i32, i32) {
    %c0_i32 = arith.constant 0 : i32
    %c0_i32_0 = arith.constant 0 : i32
    return %arg0, %c0_i32 : i32, i32
  }
}

</mosaic_0001>

<llo_original>
// kernel: net_forward.1
$region0: #{net_forward.1}
  #allocation0 [shape = 'u32[]', space=smem, size = 0x4, offset = 0x4, fixed_abs, tag = 'smem constant byte address 0x4 - core index']
  #allocation1 [shape = 'u32[72,128]{1,0:T(1,128)}', space=vmem, size = 0x9000, scoped, tag = 'internal scratch']
  %s0 = inlined_call_operand.vmem [shape: bf16[16,256], index: 0, kind: input, shape index: {}]
  %s1 = inlined_call_operand.hbm [shape: bf16[256,1024], index: 1, kind: input, shape index: {}]
  %s2 = inlined_call_operand.hbm [shape: bf16[256,512], index: 2, kind: input, shape index: {}]
  %s3 = inlined_call_operand.hbm [shape: bf16[3,128,128], index: 3, kind: input, shape index: {}]
  %s4 = inlined_call_operand.vmem [shape: f32[1,256], index: 4, kind: input, shape index: {}]
  %s5 = inlined_call_operand.vmem [shape: f32[4,128], index: 5, kind: input, shape index: {}]
  %s6 = inlined_call_operand.vmem [shape: f32[16,128], index: 6, kind: output, shape index: {}]
  %s7 = sld [smem:[#allocation0]]
  $region46: #{net_forward.1} parent=0
    _
  %s9 = ssub.s32 1, %s7
  %s10 = scalar_select 0, %s9, %s7
  $region1: #{net_forward.1} parent=0
    #allocation2 [shape = 'u8[524288]{0}', space=vmem, size = 0x80000, scoped, tag = 'input window, operand 1, single buffered']
    #allocation3 [shape = 's32[1]{0}', space=sflag, size = 0x4, scoped, tag = 'scoped memory for net_forward.1']
    #allocation4 [shape = 'u8[262144]{0}', space=vmem, size = 0x40000, scoped, tag = 'input window, operand 2, single buffered']
    #allocation5 [shape = 's32[1]{0}', space=sflag, size = 0x4, scoped, tag = 'scoped memory for net_forward.1']
    #allocation6 [shape = 'u8[98304]{0}', space=vmem, size = 0x18000, scoped, tag = 'input window, operand 3, single buffered']
    %11 = vsyncpa [#allocation3], 0
    %12 = vsyncpa [#allocation5], 0
    // Predicated region
    $region2: #{net_forward.1} parent=1 // pred_check
      _
    $region3: #{net_forward.1} parent=1 // pred_check_branch
      %14 = sbr.rel (0) target = $region5
    $region4: #{net_forward.1} parent=1 // pred_region
      _
    $region5: #{net_forward.1} parent=1 // pred_fallthru
      _
    // Predicated region
    $region6: #{net_forward.1} parent=1 // pred_check
      _
    $region7: #{net_forward.1} parent=1 // pred_check_branch
      %16 = sbr.rel (0) target = $region9
    $region8: #{net_forward.1} parent=1 // pred_region
      %18 = vsyncadd [#allocation3], 0
      %s19 = sshll.u32 %s1, 4
      %s20 = int_to_ptr.hbm [resolvable:$true] %s19
      %s21 = sshll.u32 [#allocation2], 4
      %s22 = int_to_ptr.vmem [resolvable:$true] %s21
      %27 = dma.hbm_to_vmem [thread:$0]  %s20, 16384, %s22, [#allocation3], 512, 512, 32
    $region9: #{net_forward.1} parent=1 // pred_fallthru
      _
    // Predicated region
    $region10: #{net_forward.1} parent=1 // pred_check
      _
    $region11: #{net_forward.1} parent=1 // pred_check_branch
      %29 = sbr.rel (0) target = $region13
    $region12: #{net_forward.1} parent=1 // pred_region
      %31 = vsyncadd [#allocation5], 0
      %s32 = sshll.u32 %s2, 4
      %s33 = int_to_ptr.hbm [resolvable:$true] %s32
      %s34 = sshll.u32 [#allocation4], 4
      %s35 = int_to_ptr.vmem [resolvable:$true] %s34
      %40 = dma.hbm_to_vmem [thread:$0]  %s33, 8192, %s35, [#allocation5], 256, 256, 16
    $region13: #{net_forward.1} parent=1 // pred_fallthru
      _
    // Predicated region
    $region14: #{net_forward.1} parent=1 // pred_check
      _
    $region15: #{net_forward.1} parent=1 // pred_check_branch
      %42 = sbr.rel (0) target = $region17
    $region16: #{net_forward.1} parent=1 // pred_region
      %44 = vsyncadd [#allocation5], 0
      %s45 = sshll.u32 %s3, 4
      %s46 = int_to_ptr.hbm [resolvable:$true] %s45
      %s47 = sshll.u32 [#allocation6], 4
      %s48 = int_to_ptr.vmem [resolvable:$true] %s47
      %53 = dma.hbm_to_vmem [thread:$0]  %s46, 3072, %s48, [#allocation5], 64, 64, 4
    $region17: #{net_forward.1} parent=1 // pred_fallthru
      _
    // Predicated region
    $region18: #{net_forward.1} parent=1 // pred_check
      _
    $region19: #{net_forward.1} parent=1 // pred_check_branch
      %55 = sbr.rel (0) target = $region21
    $region20: #{net_forward.1} parent=1 // pred_region
      _
    $region21: #{net_forward.1} parent=1 // pred_fallthru
      _
    // Predicated region
    $region22: #{net_forward.1} parent=1 // pred_check
      _
    $region23: #{net_forward.1} parent=1 // pred_check_branch
      %57 = sbr.rel (0) target = $region25
    $region24: #{net_forward.1} parent=1 // pred_region
      _
    $region25: #{net_forward.1} parent=1 // pred_fallthru
      _
    // Predicated region
    $region26: #{net_forward.1} parent=1 // pred_check
      _
    $region27: #{net_forward.1} parent=1 // pred_check_branch
      %59 = sbr.rel (0) target = $region29
    $region28: #{net_forward.1} parent=1 // pred_region
      %61 = dma.done [#allocation3], 16384
    $region29: #{net_forward.1} parent=1 // pred_fallthru
      _
    // Predicated region
    $region30: #{net_forward.1} parent=1 // pred_check
      _
    $region31: #{net_forward.1} parent=1 // pred_check_branch
      %63 = sbr.rel (0) target = $region33
    $region32: #{net_forward.1} parent=1 // pred_region
      %65 = dma.done [#allocation5], 8192
    $region33: #{net_forward.1} parent=1 // pred_fallthru
      _
    // Predicated region
    $region34: #{net_forward.1} parent=1 // pred_check
      _
    $region35: #{net_forward.1} parent=1 // pred_check_branch
      %67 = sbr.rel (0) target = $region37
    $region36: #{net_forward.1} parent=1 // pred_region
      %69 = dma.done [#allocation5], 3072
    $region37: #{net_forward.1} parent=1 // pred_fallthru
      _
    %v70 = vld [vmem:[%s0] sm:$0xff]
    %v71 = vld [vmem:[%s0 + $0x8] sm:$0xff]
    %v72 = vld [vmem:[#allocation2] sm:$0xff]
    %v73 = vld [vmem:[#allocation2 + $0x8] sm:$0xff]
    %v74 = vld [vmem:[#allocation2 + $0x10] sm:$0xff]
    %v75 = vld [vmem:[#allocation2 + $0x18] sm:$0xff]
    %v76 = vld [vmem:[#allocation2 + $0x20] sm:$0xff]
    %v77 = vld [vmem:[#allocation2 + $0x28] sm:$0xff]
    %v78 = vld [vmem:[#allocation2 + $0x30] sm:$0xff]
    %v79 = vld [vmem:[#allocation2 + $0x38] sm:$0xff]
    %v80 = vld [vmem:[#allocation2 + $0x40] sm:$0xff]
    %v81 = vld [vmem:[#allocation2 + $0x48] sm:$0xff]
    %v82 = vld [vmem:[#allocation2 + $0x50] sm:$0xff]
    %v83 = vld [vmem:[#allocation2 + $0x58] sm:$0xff]
    %v84 = vld [vmem:[#allocation2 + $0x60] sm:$0xff]
    %v85 = vld [vmem:[#allocation2 + $0x68] sm:$0xff]
    %v86 = vld [vmem:[#allocation2 + $0x70] sm:$0xff]
    %v87 = vld [vmem:[#allocation2 + $0x78] sm:$0xff]
    %v88 = vld [vmem:[#allocation2 + $0x80] sm:$0xff]
    %v89 = vld [vmem:[#allocation2 + $0x88] sm:$0xff]
    %v90 = vld [vmem:[#allocation2 + $0x90] sm:$0xff]
    %v91 = vld [vmem:[#allocation2 + $0x98] sm:$0xff]
    %v92 = vld [vmem:[#allocation2 + $0xa0] sm:$0xff]
    %v93 = vld [vmem:[#allocation2 + $0xa8] sm:$0xff]
    %v94 = vld [vmem:[#allocation2 + $0xb0] sm:$0xff]
    %v95 = vld [vmem:[#allocation2 + $0xb8] sm:$0xff]
    %v96 = vld [vmem:[#allocation2 + $0xc0] sm:$0xff]
    %v97 = vld [vmem:[#allocation2 + $0xc8] sm:$0xff]
    %v98 = vld [vmem:[#allocation2 + $0xd0] sm:$0xff]
    %v99 = vld [vmem:[#allocation2 + $0xd8] sm:$0xff]
    %v100 = vld [vmem:[#allocation2 + $0xe0] sm:$0xff]
    %v101 = vld [vmem:[#allocation2 + $0xe8] sm:$0xff]
    %v102 = vld [vmem:[#allocation2 + $0xf0] sm:$0xff]
    %v103 = vld [vmem:[#allocation2 + $0xf8] sm:$0xff]
    %v104 = vld [vmem:[#allocation2 + $0x100] sm:$0xff]
    %v105 = vld [vmem:[#allocation2 + $0x108] sm:$0xff]
    %v106 = vld [vmem:[#allocation2 + $0x110] sm:$0xff]
    %v107 = vld [vmem:[#allocation2 + $0x118] sm:$0xff]
    %v108 = vld [vmem:[#allocation2 + $0x120] sm:$0xff]
    %v109 = vld [vmem:[#allocation2 + $0x128] sm:$0xff]
    %v110 = vld [vmem:[#allocation2 + $0x130] sm:$0xff]
    %v111 = vld [vmem:[#allocation2 + $0x138] sm:$0xff]
    %v112 = vld [vmem:[#allocation2 + $0x140] sm:$0xff]
    %v113 = vld [vmem:[#allocation2 + $0x148] sm:$0xff]
    %v114 = vld [vmem:[#allocation2 + $0x150] sm:$0xff]
    %v115 = vld [vmem:[#allocation2 + $0x158] sm:$0xff]
    %v116 = vld [vmem:[#allocation2 + $0x160] sm:$0xff]
    %v117 = vld [vmem:[#allocation2 + $0x168] sm:$0xff]
    %v118 = vld [vmem:[#allocation2 + $0x170] sm:$0xff]
    %v119 = vld [vmem:[#allocation2 + $0x178] sm:$0xff]
    %v120 = vld [vmem:[#allocation2 + $0x180] sm:$0xff]
    %v121 = vld [vmem:[#allocation2 + $0x188] sm:$0xff]
    %v122 = vld [vmem:[#allocation2 + $0x190] sm:$0xff]
    %v123 = vld [vmem:[#allocation2 + $0x198] sm:$0xff]
    %v124 = vld [vmem:[#allocation2 + $0x1a0] sm:$0xff]
    %v125 = vld [vmem:[#allocation2 + $0x1a8] sm:$0xff]
    %v126 = vld [vmem:[#allocation2 + $0x1b0] sm:$0xff]
    %v127 = vld [vmem:[#allocation2 + $0x1b8] sm:$0xff]
    %v128 = vld [vmem:[#allocation2 + $0x1c0] sm:$0xff]
    %v129 = vld [vmem:[#allocation2 + $0x1c8] sm:$0xff]
    %v130 = vld [vmem:[#allocation2 + $0x1d0] sm:$0xff]
    %v131 = vld [vmem:[#allocation2 + $0x1d8] sm:$0xff]
    %v132 = vld [vmem:[#allocation2 + $0x1e0] sm:$0xff]
    %v133 = vld [vmem:[#allocation2 + $0x1e8] sm:$0xff]
    %v134 = vld [vmem:[#allocation2 + $0x1f0] sm:$0xff]
    %v135 = vld [vmem:[#allocation2 + $0x1f8] sm:$0xff]
    %v136 = vld [vmem:[#allocation2 + $0x200] sm:$0xff]
    %v137 = vld [vmem:[#allocation2 + $0x208] sm:$0xff]
    %v138 = vld [vmem:[#allocation2 + $0x210] sm:$0xff]
    %v139 = vld [vmem:[#allocation2 + $0x218] sm:$0xff]
    %v140 = vld [vmem:[#allocation2 + $0x220] sm:$0xff]
    %v141 = vld [vmem:[#allocation2 + $0x228] sm:$0xff]
    %v142 = vld [vmem:[#allocation2 + $0x230] sm:$0xff]
    %v143 = vld [vmem:[#allocation2 + $0x238] sm:$0xff]
    %v144 = vld [vmem:[#allocation2 + $0x240] sm:$0xff]
    %v145 = vld [vmem:[#allocation2 + $0x248] sm:$0xff]
    %v146 = vld [vmem:[#allocation2 + $0x250] sm:$0xff]
    %v147 = vld [vmem:[#allocation2 + $0x258] sm:$0xff]
    %v148 = vld [vmem:[#allocation2 + $0x260] sm:$0xff]
    %v149 = vld [vmem:[#allocation2 + $0x268] sm:$0xff]
    %v150 = vld [vmem:[#allocation2 + $0x270] sm:$0xff]
    %v151 = vld [vmem:[#allocation2 + $0x278] sm:$0xff]
    %v152 = vld [vmem:[#allocation2 + $0x280] sm:$0xff]
    %v153 = vld [vmem:[#allocation2 + $0x288] sm:$0xff]
    %v154 = vld [vmem:[#allocation2 + $0x290] sm:$0xff]
    %v155 = vld [vmem:[#allocation2 + $0x298] sm:$0xff]
    %v156 = vld [vmem:[#allocation2 + $0x2a0] sm:$0xff]
    %v157 = vld [vmem:[#allocation2 + $0x2a8] sm:$0xff]
    %v158 = vld [vmem:[#allocation2 + $0x2b0] sm:$0xff]
    %v159 = vld [vmem:[#allocation2 + $0x2b8] sm:$0xff]
    %v160 = vld [vmem:[#allocation2 + $0x2c0] sm:$0xff]
    %v161 = vld [vmem:[#allocation2 + $0x2c8] sm:$0xff]
    %v162 = vld [vmem:[#allocation2 + $0x2d0] sm:$0xff]
    %v163 = vld [vmem:[#allocation2 + $0x2d8] sm:$0xff]
    %v164 = vld [vmem:[#allocation2 + $0x2e0] sm:$0xff]
    %v165 = vld [vmem:[#allocation2 + $0x2e8] sm:$0xff]
    %v166 = vld [vmem:[#allocation2 + $0x2f0] sm:$0xff]
    %v167 = vld [vmem:[#allocation2 + $0x2f8] sm:$0xff]
    %v168 = vld [vmem:[#allocation2 + $0x300] sm:$0xff]
    %v169 = vld [vmem:[#allocation2 + $0x308] sm:$0xff]
    %v170 = vld [vmem:[#allocation2 + $0x310] sm:$0xff]
    %v171 = vld [vmem:[#allocation2 + $0x318] sm:$0xff]
    %v172 = vld [vmem:[#allocation2 + $0x320] sm:$0xff]
    %v173 = vld [vmem:[#allocation2 + $0x328] sm:$0xff]
    %v174 = vld [vmem:[#allocation2 + $0x330] sm:$0xff]
    %v175 = vld [vmem:[#allocation2 + $0x338] sm:$0xff]
    %v176 = vld [vmem:[#allocation2 + $0x340] sm:$0xff]
    %v177 = vld [vmem:[#allocation2 + $0x348] sm:$0xff]
    %v178 = vld [vmem:[#allocation2 + $0x350] sm:$0xff]
    %v179 = vld [vmem:[#allocation2 + $0x358] sm:$0xff]
    %v180 = vld [vmem:[#allocation2 + $0x360] sm:$0xff]
    %v181 = vld [vmem:[#allocation2 + $0x368] sm:$0xff]
    %v182 = vld [vmem:[#allocation2 + $0x370] sm:$0xff]
    %v183 = vld [vmem:[#allocation2 + $0x378] sm:$0xff]
    %v184 = vld [vmem:[#allocation2 + $0x380] sm:$0xff]
    %v185 = vld [vmem:[#allocation2 + $0x388] sm:$0xff]
    %v186 = vld [vmem:[#allocation2 + $0x390] sm:$0xff]
    %v187 = vld [vmem:[#allocation2 + $0x398] sm:$0xff]
    %v188 = vld [vmem:[#allocation2 + $0x3a0] sm:$0xff]
    %v189 = vld [vmem:[#allocation2 + $0x3a8] sm:$0xff]
    %v190 = vld [vmem:[#allocation2 + $0x3b0] sm:$0xff]
    %v191 = vld [vmem:[#allocation2 + $0x3b8] sm:$0xff]
    %v192 = vld [vmem:[#allocation2 + $0x3c0] sm:$0xff]
    %v193 = vld [vmem:[#allocation2 + $0x3c8] sm:$0xff]
    %v194 = vld [vmem:[#allocation2 + $0x3d0] sm:$0xff]
    %v195 = vld [vmem:[#allocation2 + $0x3d8] sm:$0xff]
    %v196 = vld [vmem:[#allocation2 + $0x3e0] sm:$0xff]
    %v197 = vld [vmem:[#allocation2 + $0x3e8] sm:$0xff]
    %v198 = vld [vmem:[#allocation2 + $0x3f0] sm:$0xff]
    %v199 = vld [vmem:[#allocation2 + $0x3f8] sm:$0xff]
    %v202 = vunpack.c.l.b16 %v70
    %v203 = vunpack.c.h.b16 %v70
    %v204 = vunpack.c.l.b16 %v71
    %v205 = vunpack.c.h.b16 %v71
    %v206 = vpack.c.b16 %v204, %v202
    %v207 = vpack.c.b16 %v205, %v203
    %v338 = vunpack.c.l.b16 %v72
    %v339 = vunpack.c.h.b16 %v72
    %v340 = vunpack.c.l.b16 %v73
    %v341 = vunpack.c.h.b16 %v73
    %v342 = vunpack.c.l.b16 %v74
    %v343 = vunpack.c.h.b16 %v74
    %v344 = vunpack.c.l.b16 %v75
    %v345 = vunpack.c.h.b16 %v75
    %v346 = vunpack.c.l.b16 %v76
    %v347 = vunpack.c.h.b16 %v76
    %v348 = vunpack.c.l.b16 %v77
    %v349 = vunpack.c.h.b16 %v77
    %v350 = vunpack.c.l.b16 %v78
    %v351 = vunpack.c.h.b16 %v78
    %v352 = vunpack.c.l.b16 %v79
    %v353 = vunpack.c.h.b16 %v79
    %v354 = vunpack.c.l.b16 %v80
    %v355 = vunpack.c.h.b16 %v80
    %v356 = vunpack.c.l.b16 %v81
    %v357 = vunpack.c.h.b16 %v81
    %v358 = vunpack.c.l.b16 %v82
    %v359 = vunpack.c.h.b16 %v82
    %v360 = vunpack.c.l.b16 %v83
    %v361 = vunpack.c.h.b16 %v83
    %v362 = vunpack.c.l.b16 %v84
    %v363 = vunpack.c.h.b16 %v84
    %v364 = vunpack.c.l.b16 %v85
    %v365 = vunpack.c.h.b16 %v85
    %v366 = vunpack.c.l.b16 %v86
    %v367 = vunpack.c.h.b16 %v86
    %v368 = vunpack.c.l.b16 %v87
    %v369 = vunpack.c.h.b16 %v87
    %v370 = vunpack.c.l.b16 %v88
    %v371 = vunpack.c.h.b16 %v88
    %v372 = vunpack.c.l.b16 %v89
    %v373 = vunpack.c.h.b16 %v89
    %v374 = vunpack.c.l.b16 %v90
    %v375 = vunpack.c.h.b16 %v90
    %v376 = vunpack.c.l.b16 %v91
    %v377 = vunpack.c.h.b16 %v91
    %v378 = vunpack.c.l.b16 %v92
    %v379 = vunpack.c.h.b16 %v92
    %v380 = vunpack.c.l.b16 %v93
    %v381 = vunpack.c.h.b16 %v93
    %v382 = vunpack.c.l.b16 %v94
    %v383 = vunpack.c.h.b16 %v94
    %v384 = vunpack.c.l.b16 %v95
    %v385 = vunpack.c.h.b16 %v95
    %v386 = vunpack.c.l.b16 %v96
    %v387 = vunpack.c.h.b16 %v96
    %v388 = vunpack.c.l.b16 %v97
    %v389 = vunpack.c.h.b16 %v97
    %v390 = vunpack.c.l.b16 %v98
    %v391 = vunpack.c.h.b16 %v98
    %v392 = vunpack.c.l.b16 %v99
    %v393 = vunpack.c.h.b16 %v99
    %v394 = vunpack.c.l.b16 %v100
    %v395 = vunpack.c.h.b16 %v100
    %v396 = vunpack.c.l.b16 %v101
    %v397 = vunpack.c.h.b16 %v101
    %v398 = vunpack.c.l.b16 %v102
    %v399 = vunpack.c.h.b16 %v102
    %v400 = vunpack.c.l.b16 %v103
    %v401 = vunpack.c.h.b16 %v103
    %v402 = vunpack.c.l.b16 %v104
    %v403 = vunpack.c.h.b16 %v104
    %v404 = vunpack.c.l.b16 %v105
    %v405 = vunpack.c.h.b16 %v105
    %v406 = vunpack.c.l.b16 %v106
    %v407 = vunpack.c.h.b16 %v106
    %v408 = vunpack.c.l.b16 %v107
    %v409 = vunpack.c.h.b16 %v107
    %v410 = vunpack.c.l.b16 %v108
    %v411 = vunpack.c.h.b16 %v108
    %v412 = vunpack.c.l.b16 %v109
    %v413 = vunpack.c.h.b16 %v109
    %v414 = vunpack.c.l.b16 %v110
    %v415 = vunpack.c.h.b16 %v110
    %v416 = vunpack.c.l.b16 %v111
    %v417 = vunpack.c.h.b16 %v111
    %v418 = vunpack.c.l.b16 %v112
    %v419 = vunpack.c.h.b16 %v112
    %v420 = vunpack.c.l.b16 %v113
    %v421 = vunpack.c.h.b16 %v113
    %v422 = vunpack.c.l.b16 %v114
    %v423 = vunpack.c.h.b16 %v114
    %v424 = vunpack.c.l.b16 %v115
    %v425 = vunpack.c.h.b16 %v115
    %v426 = vunpack.c.l.b16 %v116
    %v427 = vunpack.c.h.b16 %v116
    %v428 = vunpack.c.l.b16 %v117
    %v429 = vunpack.c.h.b16 %v117
    %v430 = vunpack.c.l.b16 %v118
    %v431 = vunpack.c.h.b16 %v118
    %v432 = vunpack.c.l.b16 %v119
    %v433 = vunpack.c.h.b16 %v119
    %v434 = vunpack.c.l.b16 %v120
    %v435 = vunpack.c.h.b16 %v120
    %v436 = vunpack.c.l.b16 %v121
    %v437 = vunpack.c.h.b16 %v121
    %v438 = vunpack.c.l.b16 %v122
    %v439 = vunpack.c.h.b16 %v122
    %v440 = vunpack.c.l.b16 %v123
    %v441 = vunpack.c.h.b16 %v123
    %v442 = vunpack.c.l.b16 %v124
    %v443 = vunpack.c.h.b16 %v124
    %v444 = vunpack.c.l.b16 %v125
    %v445 = vunpack.c.h.b16 %v125
    %v446 = vunpack.c.l.b16 %v126
    %v447 = vunpack.c.h.b16 %v126
    %v448 = vunpack.c.l.b16 %v127
    %v449 = vunpack.c.h.b16 %v127
    %v450 = vunpack.c.l.b16 %v128
    %v451 = vunpack.c.h.b16 %v128
    %v452 = vunpack.c.l.b16 %v129
    %v453 = vunpack.c.h.b16 %v129
    %v454 = vunpack.c.l.b16 %v130
    %v455 = vunpack.c.h.b16 %v130
    %v456 = vunpack.c.l.b16 %v131
    %v457 = vunpack.c.h.b16 %v131
    %v458 = vunpack.c.l.b16 %v132
    %v459 = vunpack.c.h.b16 %v132
    %v460 = vunpack.c.l.b16 %v133
    %v461 = vunpack.c.h.b16 %v133
    %v462 = vunpack.c.l.b16 %v134
    %v463 = vunpack.c.h.b16 %v134
    %v464 = vunpack.c.l.b16 %v135
    %v465 = vunpack.c.h.b16 %v135
    %v466 = vunpack.c.l.b16 %v136
    %v467 = vunpack.c.h.b16 %v136
    %v468 = vunpack.c.l.b16 %v137
    %v469 = vunpack.c.h.b16 %v137
    %v470 = vunpack.c.l.b16 %v138
    %v471 = vunpack.c.h.b16 %v138
    %v472 = vunpack.c.l.b16 %v139
    %v473 = vunpack.c.h.b16 %v139
    %v474 = vunpack.c.l.b16 %v140
    %v475 = vunpack.c.h.b16 %v140
    %v476 = vunpack.c.l.b16 %v141
    %v477 = vunpack.c.h.b16 %v141
    %v478 = vunpack.c.l.b16 %v142
    %v479 = vunpack.c.h.b16 %v142
    %v480 = vunpack.c.l.b16 %v143
    %v481 = vunpack.c.h.b16 %v143
    %v482 = vunpack.c.l.b16 %v144
    %v483 = vunpack.c.h.b16 %v144
    %v484 = vunpack.c.l.b16 %v145
    %v485 = vunpack.c.h.b16 %v145
    %v486 = vunpack.c.l.b16 %v146
    %v487 = vunpack.c.h.b16 %v146
    %v488 = vunpack.c.l.b16 %v147
    %v489 = vunpack.c.h.b16 %v147
    %v490 = vunpack.c.l.b16 %v148
    %v491 = vunpack.c.h.b16 %v148
    %v492 = vunpack.c.l.b16 %v149
    %v493 = vunpack.c.h.b16 %v149
    %v494 = vunpack.c.l.b16 %v150
    %v495 = vunpack.c.h.b16 %v150
    %v496 = vunpack.c.l.b16 %v151
    %v497 = vunpack.c.h.b16 %v151
    %v498 = vunpack.c.l.b16 %v152
    %v499 = vunpack.c.h.b16 %v152
    %v500 = vunpack.c.l.b16 %v153
    %v501 = vunpack.c.h.b16 %v153
    %v502 = vunpack.c.l.b16 %v154
    %v503 = vunpack.c.h.b16 %v154
    %v504 = vunpack.c.l.b16 %v155
    %v505 = vunpack.c.h.b16 %v155
    %v506 = vunpack.c.l.b16 %v156
    %v507 = vunpack.c.h.b16 %v156
    %v508 = vunpack.c.l.b16 %v157
    %v509 = vunpack.c.h.b16 %v157
    %v510 = vunpack.c.l.b16 %v158
    %v511 = vunpack.c.h.b16 %v158
    %v512 = vunpack.c.l.b16 %v159
    %v513 = vunpack.c.h.b16 %v159
    %v514 = vunpack.c.l.b16 %v160
    %v515 = vunpack.c.h.b16 %v160
    %v516 = vunpack.c.l.b16 %v161
    %v517 = vunpack.c.h.b16 %v161
    %v518 = vunpack.c.l.b16 %v162
    %v519 = vunpack.c.h.b16 %v162
    %v520 = vunpack.c.l.b16 %v163
    %v521 = vunpack.c.h.b16 %v163
    %v522 = vunpack.c.l.b16 %v164
    %v523 = vunpack.c.h.b16 %v164
    %v524 = vunpack.c.l.b16 %v165
    %v525 = vunpack.c.h.b16 %v165
    %v526 = vunpack.c.l.b16 %v166
    %v527 = vunpack.c.h.b16 %v166
    %v528 = vunpack.c.l.b16 %v167
    %v529 = vunpack.c.h.b16 %v167
    %v530 = vunpack.c.l.b16 %v168
    %v531 = vunpack.c.h.b16 %v168
    %v532 = vunpack.c.l.b16 %v169
    %v533 = vunpack.c.h.b16 %v169
    %v534 = vunpack.c.l.b16 %v170
    %v535 = vunpack.c.h.b16 %v170
    %v536 = vunpack.c.l.b16 %v171
    %v537 = vunpack.c.h.b16 %v171
    %v538 = vunpack.c.l.b16 %v172
    %v539 = vunpack.c.h.b16 %v172
    %v540 = vunpack.c.l.b16 %v173
    %v541 = vunpack.c.h.b16 %v173
    %v542 = vunpack.c.l.b16 %v174
    %v543 = vunpack.c.h.b16 %v174
    %v544 = vunpack.c.l.b16 %v175
    %v545 = vunpack.c.h.b16 %v175
    %v546 = vunpack.c.l.b16 %v176
    %v547 = vunpack.c.h.b16 %v176
    %v548 = vunpack.c.l.b16 %v177
    %v549 = vunpack.c.h.b16 %v177
    %v550 = vunpack.c.l.b16 %v178
    %v551 = vunpack.c.h.b16 %v178
    %v552 = vunpack.c.l.b16 %v179
    %v553 = vunpack.c.h.b16 %v179
    %v554 = vunpack.c.l.b16 %v180
    %v555 = vunpack.c.h.b16 %v180
    %v556 = vunpack.c.l.b16 %v181
    %v557 = vunpack.c.h.b16 %v181
    %v558 = vunpack.c.l.b16 %v182
    %v559 = vunpack.c.h.b16 %v182
    %v560 = vunpack.c.l.b16 %v183
    %v561 = vunpack.c.h.b16 %v183
    %v562 = vunpack.c.l.b16 %v184
    %v563 = vunpack.c.h.b16 %v184
    %v564 = vunpack.c.l.b16 %v185
    %v565 = vunpack.c.h.b16 %v185
    %v566 = vunpack.c.l.b16 %v186
    %v567 = vunpack.c.h.b16 %v186
    %v568 = vunpack.c.l.b16 %v187
    %v569 = vunpack.c.h.b16 %v187
    %v570 = vunpack.c.l.b16 %v188
    %v571 = vunpack.c.h.b16 %v188
    %v572 = vunpack.c.l.b16 %v189
    %v573 = vunpack.c.h.b16 %v189
    %v574 = vunpack.c.l.b16 %v190
    %v575 = vunpack.c.h.b16 %v190
    %v576 = vunpack.c.l.b16 %v191
    %v577 = vunpack.c.h.b16 %v191
    %v578 = vunpack.c.l.b16 %v192
    %v579 = vunpack.c.h.b16 %v192
    %v580 = vunpack.c.l.b16 %v193
    %v581 = vunpack.c.h.b16 %v193
    %v582 = vunpack.c.l.b16 %v194
    %v583 = vunpack.c.h.b16 %v194
    %v584 = vunpack.c.l.b16 %v195
    %v585 = vunpack.c.h.b16 %v195
    %v586 = vunpack.c.l.b16 %v196
    %v587 = vunpack.c.h.b16 %v196
    %v588 = vunpack.c.l.b16 %v197
    %v589 = vunpack.c.h.b16 %v197
    %v590 = vunpack.c.l.b16 %v198
    %v591 = vunpack.c.h.b16 %v198
    %v592 = vunpack.c.l.b16 %v199
    %v593 = vunpack.c.h.b16 %v199
    %v594 = vpack.c.b16 %v346, %v338
    %v595 = vpack.c.b16 %v347, %v339
    %v596 = vpack.c.b16 %v348, %v340
    %v597 = vpack.c.b16 %v349, %v341
    %v598 = vpack.c.b16 %v350, %v342
    %v599 = vpack.c.b16 %v351, %v343
    %v600 = vpack.c.b16 %v352, %v344
    %v601 = vpack.c.b16 %v353, %v345
    %v602 = vpack.c.b16 %v362, %v354
    %v603 = vpack.c.b16 %v363, %v355
    %v604 = vpack.c.b16 %v364, %v356
    %v605 = vpack.c.b16 %v365, %v357
    %v606 = vpack.c.b16 %v366, %v358
    %v607 = vpack.c.b16 %v367, %v359
    %v608 = vpack.c.b16 %v368, %v360
    %v609 = vpack.c.b16 %v369, %v361
    %v610 = vpack.c.b16 %v378, %v370
    %v611 = vpack.c.b16 %v379, %v371
    %v612 = vpack.c.b16 %v380, %v372
    %v613 = vpack.c.b16 %v381, %v373
    %v614 = vpack.c.b16 %v382, %v374
    %v615 = vpack.c.b16 %v383, %v375
    %v616 = vpack.c.b16 %v384, %v376
    %v617 = vpack.c.b16 %v385, %v377
    %v618 = vpack.c.b16 %v394, %v386
    %v619 = vpack.c.b16 %v395, %v387
    %v620 = vpack.c.b16 %v396, %v388
    %v621 = vpack.c.b16 %v397, %v389
    %v622 = vpack.c.b16 %v398, %v390
    %v623 = vpack.c.b16 %v399, %v391
    %v624 = vpack.c.b16 %v400, %v392
    %v625 = vpack.c.b16 %v401, %v393
    %v626 = vpack.c.b16 %v410, %v402
    %v627 = vpack.c.b16 %v411, %v403
    %v628 = vpack.c.b16 %v412, %v404
    %v629 = vpack.c.b16 %v413, %v405
    %v630 = vpack.c.b16 %v414, %v406
    %v631 = vpack.c.b16 %v415, %v407
    %v632 = vpack.c.b16 %v416, %v408
    %v633 = vpack.c.b16 %v417, %v409
    %v634 = vpack.c.b16 %v426, %v418
    %v635 = vpack.c.b16 %v427, %v419
    %v636 = vpack.c.b16 %v428, %v420
    %v637 = vpack.c.b16 %v429, %v421
    %v638 = vpack.c.b16 %v430, %v422
    %v639 = vpack.c.b16 %v431, %v423
    %v640 = vpack.c.b16 %v432, %v424
    %v641 = vpack.c.b16 %v433, %v425
    %v642 = vpack.c.b16 %v442, %v434
    %v643 = vpack.c.b16 %v443, %v435
    %v644 = vpack.c.b16 %v444, %v436
    %v645 = vpack.c.b16 %v445, %v437
    %v646 = vpack.c.b16 %v446, %v438
    %v647 = vpack.c.b16 %v447, %v439
    %v648 = vpack.c.b16 %v448, %v440
    %v649 = vpack.c.b16 %v449, %v441
    %v650 = vpack.c.b16 %v458, %v450
    %v651 = vpack.c.b16 %v459, %v451
    %v652 = vpack.c.b16 %v460, %v452
    %v653 = vpack.c.b16 %v461, %v453
    %v654 = vpack.c.b16 %v462, %v454
    %v655 = vpack.c.b16 %v463, %v455
    %v656 = vpack.c.b16 %v464, %v456
    %v657 = vpack.c.b16 %v465, %v457
    %v658 = vpack.c.b16 %v474, %v466
    %v659 = vpack.c.b16 %v475, %v467
    %v660 = vpack.c.b16 %v476, %v468
    %v661 = vpack.c.b16 %v477, %v469
    %v662 = vpack.c.b16 %v478, %v470
    %v663 = vpack.c.b16 %v479, %v471
    %v664 = vpack.c.b16 %v480, %v472
    %v665 = vpack.c.b16 %v481, %v473
    %v666 = vpack.c.b16 %v490, %v482
    %v667 = vpack.c.b16 %v491, %v483
    %v668 = vpack.c.b16 %v492, %v484
    %v669 = vpack.c.b16 %v493, %v485
    %v670 = vpack.c.b16 %v494, %v486
    %v671 = vpack.c.b16 %v495, %v487
    %v672 = vpack.c.b16 %v496, %v488
    %v673 = vpack.c.b16 %v497, %v489
    %v674 = vpack.c.b16 %v506, %v498
    %v675 = vpack.c.b16 %v507, %v499
    %v676 = vpack.c.b16 %v508, %v500
    %v677 = vpack.c.b16 %v509, %v501
    %v678 = vpack.c.b16 %v510, %v502
    %v679 = vpack.c.b16 %v511, %v503
    %v680 = vpack.c.b16 %v512, %v504
    %v681 = vpack.c.b16 %v513, %v505
    %v682 = vpack.c.b16 %v522, %v514
    %v683 = vpack.c.b16 %v523, %v515
    %v684 = vpack.c.b16 %v524, %v516
    %v685 = vpack.c.b16 %v525, %v517
    %v686 = vpack.c.b16 %v526, %v518
    %v687 = vpack.c.b16 %v527, %v519
    %v688 = vpack.c.b16 %v528, %v520
    %v689 = vpack.c.b16 %v529, %v521
    %v690 = vpack.c.b16 %v538, %v530
    %v691 = vpack.c.b16 %v539, %v531
    %v692 = vpack.c.b16 %v540, %v532
    %v693 = vpack.c.b16 %v541, %v533
    %v694 = vpack.c.b16 %v542, %v534
    %v695 = vpack.c.b16 %v543, %v535
    %v696 = vpack.c.b16 %v544, %v536
    %v697 = vpack.c.b16 %v545, %v537
    %v698 = vpack.c.b16 %v554, %v546
    %v699 = vpack.c.b16 %v555, %v547
    %v700 = vpack.c.b16 %v556, %v548
    %v701 = vpack.c.b16 %v557, %v549
    %v702 = vpack.c.b16 %v558, %v550
    %v703 = vpack.c.b16 %v559, %v551
    %v704 = vpack.c.b16 %v560, %v552
    %v705 = vpack.c.b16 %v561, %v553
    %v706 = vpack.c.b16 %v570, %v562
    %v707 = vpack.c.b16 %v571, %v563
    %v708 = vpack.c.b16 %v572, %v564
    %v709 = vpack.c.b16 %v573, %v565
    %v710 = vpack.c.b16 %v574, %v566
    %v711 = vpack.c.b16 %v575, %v567
    %v712 = vpack.c.b16 %v576, %v568
    %v713 = vpack.c.b16 %v577, %v569
    %v714 = vpack.c.b16 %v586, %v578
    %v715 = vpack.c.b16 %v587, %v579
    %v716 = vpack.c.b16 %v588, %v580
    %v717 = vpack.c.b16 %v589, %v581
    %v718 = vpack.c.b16 %v590, %v582
    %v719 = vpack.c.b16 %v591, %v583
    %v720 = vpack.c.b16 %v592, %v584
    %v721 = vpack.c.b16 %v593, %v585
    %850 = vmatpush.bf16.msra.mxu0 %v650
    %851 = vmatpush.bf16.msra.mxu0 %v642
    %852 = vmatpush.bf16.msra.mxu0 %v634
    %853 = vmatpush.bf16.msra.mxu0 %v626
    %854 = vmatpush.bf16.msra.mxu0 %v618
    %855 = vmatpush.bf16.msra.mxu0 %v610
    %856 = vmatpush.bf16.msra.mxu0 %v602
    %857 = vmatpush.bf16.msra.mxu0 %v594
    %858 = vmatmul.bf16.gmra.mxu0 %v206
    %v859 = vpop.f32.mrf.mxu0
    %v860 = vadd.f32 0.0, %v859
    %v861 = vpop.f32.mrf.mxu0
    %v862 = vadd.f32 0.0, %v861
    %863 = vdwg.mxu0
    %864 = vmatpush.bf16.msra.mxu0 %v714
    %865 = vmatpush.bf16.msra.mxu0 %v706
    %866 = vmatpush.bf16.msra.mxu0 %v698
    %867 = vmatpush.bf16.msra.mxu0 %v690
    %868 = vmatpush.bf16.msra.mxu0 %v682
    %869 = vmatpush.bf16.msra.mxu0 %v674
    %870 = vmatpush.bf16.msra.mxu0 %v666
    %871 = vmatpush.bf16.msra.mxu0 %v658
    %872 = vmatmul.bf16.gmra.mxu0 %v207
    %v873 = vpop.f32.mrf.mxu0
    %v874 = vadd.f32 %v860, %v873
    %v875 = vpop.f32.mrf.mxu0
    %v876 = vadd.f32 %v862, %v875
    %877 = vdwg.mxu0
    %878 = vmatpush.bf16.msra.mxu0 %v651
    %879 = vmatpush.bf16.msra.mxu0 %v643
    %880 = vmatpush.bf16.msra.mxu0 %v635
    %881 = vmatpush.bf16.msra.mxu0 %v627
    %882 = vmatpush.bf16.msra.mxu0 %v619
    %883 = vmatpush.bf16.msra.mxu0 %v611
    %884 = vmatpush.bf16.msra.mxu0 %v603
    %885 = vmatpush.bf16.msra.mxu0 %v595
    %886 = vmatmul.bf16.gmra.mxu0 %v206
    %v887 = vpop.f32.mrf.mxu0
    %v888 = vadd.f32 0.0, %v887
    %v889 = vpop.f32.mrf.mxu0
    %v890 = vadd.f32 0.0, %v889
    %891 = vdwg.mxu0
    %892 = vmatpush.bf16.msra.mxu0 %v715
    %893 = vmatpush.bf16.msra.mxu0 %v707
    %894 = vmatpush.bf16.msra.mxu0 %v699
    %895 = vmatpush.bf16.msra.mxu0 %v691
    %896 = vmatpush.bf16.msra.mxu0 %v683
    %897 = vmatpush.bf16.msra.mxu0 %v675
    %898 = vmatpush.bf16.msra.mxu0 %v667
    %899 = vmatpush.bf16.msra.mxu0 %v659
    %900 = vmatmul.bf16.gmra.mxu0 %v207
    %v901 = vpop.f32.mrf.mxu0
    %v902 = vadd.f32 %v888, %v901
    %v903 = vpop.f32.mrf.mxu0
    %v904 = vadd.f32 %v890, %v903
    %905 = vdwg.mxu0
    %906 = vmatpush.bf16.msra.mxu0 %v652
    %907 = vmatpush.bf16.msra.mxu0 %v644
    %908 = vmatpush.bf16.msra.mxu0 %v636
    %909 = vmatpush.bf16.msra.mxu0 %v628
    %910 = vmatpush.bf16.msra.mxu0 %v620
    %911 = vmatpush.bf16.msra.mxu0 %v612
    %912 = vmatpush.bf16.msra.mxu0 %v604
    %913 = vmatpush.bf16.msra.mxu0 %v596
    %914 = vmatmul.bf16.gmra.mxu0 %v206
    %v915 = vpop.f32.mrf.mxu0
    %v916 = vadd.f32 0.0, %v915
    %v917 = vpop.f32.mrf.mxu0
    %v918 = vadd.f32 0.0, %v917
    %919 = vdwg.mxu0
    %920 = vmatpush.bf16.msra.mxu0 %v716
    %921 = vmatpush.bf16.msra.mxu0 %v708
    %922 = vmatpush.bf16.msra.mxu0 %v700
    %923 = vmatpush.bf16.msra.mxu0 %v692
    %924 = vmatpush.bf16.msra.mxu0 %v684
    %925 = vmatpush.bf16.msra.mxu0 %v676
    %926 = vmatpush.bf16.msra.mxu0 %v668
    %927 = vmatpush.bf16.msra.mxu0 %v660
    %928 = vmatmul.bf16.gmra.mxu0 %v207
    %v929 = vpop.f32.mrf.mxu0
    %v930 = vadd.f32 %v916, %v929
    %v931 = vpop.f32.mrf.mxu0
    %v932 = vadd.f32 %v918, %v931
    %933 = vdwg.mxu0
    %934 = vmatpush.bf16.msra.mxu0 %v653
    %935 = vmatpush.bf16.msra.mxu0 %v645
    %936 = vmatpush.bf16.msra.mxu0 %v637
    %937 = vmatpush.bf16.msra.mxu0 %v629
    %938 = vmatpush.bf16.msra.mxu0 %v621
    %939 = vmatpush.bf16.msra.mxu0 %v613
    %940 = vmatpush.bf16.msra.mxu0 %v605
    %941 = vmatpush.bf16.msra.mxu0 %v597
    %942 = vmatmul.bf16.gmra.mxu0 %v206
    %v943 = vpop.f32.mrf.mxu0
    %v944 = vadd.f32 0.0, %v943
    %v945 = vpop.f32.mrf.mxu0
    %v946 = vadd.f32 0.0, %v945
    %947 = vdwg.mxu0
    %948 = vmatpush.bf16.msra.mxu0 %v717
    %949 = vmatpush.bf16.msra.mxu0 %v709
    %950 = vmatpush.bf16.msra.mxu0 %v701
    %951 = vmatpush.bf16.msra.mxu0 %v693
    %952 = vmatpush.bf16.msra.mxu0 %v685
    %953 = vmatpush.bf16.msra.mxu0 %v677
    %954 = vmatpush.bf16.msra.mxu0 %v669
    %955 = vmatpush.bf16.msra.mxu0 %v661
    %956 = vmatmul.bf16.gmra.mxu0 %v207
    %v957 = vpop.f32.mrf.mxu0
    %v958 = vadd.f32 %v944, %v957
    %v959 = vpop.f32.mrf.mxu0
    %v960 = vadd.f32 %v946, %v959
    %961 = vdwg.mxu0
    %962 = vmatpush.bf16.msra.mxu0 %v654
    %963 = vmatpush.bf16.msra.mxu0 %v646
    %964 = vmatpush.bf16.msra.mxu0 %v638
    %965 = vmatpush.bf16.msra.mxu0 %v630
    %966 = vmatpush.bf16.msra.mxu0 %v622
    %967 = vmatpush.bf16.msra.mxu0 %v614
    %968 = vmatpush.bf16.msra.mxu0 %v606
    %969 = vmatpush.bf16.msra.mxu0 %v598
    %970 = vmatmul.bf16.gmra.mxu0 %v206
    %v971 = vpop.f32.mrf.mxu0
    %v972 = vadd.f32 0.0, %v971
    %v973 = vpop.f32.mrf.mxu0
    %v974 = vadd.f32 0.0, %v973
    %975 = vdwg.mxu0
    %976 = vmatpush.bf16.msra.mxu0 %v718
    %977 = vmatpush.bf16.msra.mxu0 %v710
    %978 = vmatpush.bf16.msra.mxu0 %v702
    %979 = vmatpush.bf16.msra.mxu0 %v694
    %980 = vmatpush.bf16.msra.mxu0 %v686
    %981 = vmatpush.bf16.msra.mxu0 %v678
    %982 = vmatpush.bf16.msra.mxu0 %v670
    %983 = vmatpush.bf16.msra.mxu0 %v662
    %984 = vmatmul.bf16.gmra.mxu0 %v207
    %v985 = vpop.f32.mrf.mxu0
    %v986 = vadd.f32 %v972, %v985
    %v987 = vpop.f32.mrf.mxu0
    %v988 = vadd.f32 %v974, %v987
    %989 = vdwg.mxu0
    %990 = vmatpush.bf16.msra.mxu0 %v655
    %991 = vmatpush.bf16.msra.mxu0 %v647
    %992 = vmatpush.bf16.msra.mxu0 %v639
    %993 = vmatpush.bf16.msra.mxu0 %v631
    %994 = vmatpush.bf16.msra.mxu0 %v623
    %995 = vmatpush.bf16.msra.mxu0 %v615
    %996 = vmatpush.bf16.msra.mxu0 %v607
    %997 = vmatpush.bf16.msra.mxu0 %v599
    %998 = vmatmul.bf16.gmra.mxu0 %v206
    %v999 = vpop.f32.mrf.mxu0
    %v1000 = vadd.f32 0.0, %v999
    %v1001 = vpop.f32.mrf.mxu0
    %v1002 = vadd.f32 0.0, %v1001
    %1003 = vdwg.mxu0
    %1004 = vmatpush.bf16.msra.mxu0 %v719
    %1005 = vmatpush.bf16.msra.mxu0 %v711
    %1006 = vmatpush.bf16.msra.mxu0 %v703
    %1007 = vmatpush.bf16.msra.mxu0 %v695
    %1008 = vmatpush.bf16.msra.mxu0 %v687
    %1009 = vmatpush.bf16.msra.mxu0 %v679
    %1010 = vmatpush.bf16.msra.mxu0 %v671
    %1011 = vmatpush.bf16.msra.mxu0 %v663
    %1012 = vmatmul.bf16.gmra.mxu0 %v207
    %v1013 = vpop.f32.mrf.mxu0
    %v1014 = vadd.f32 %v1000, %v1013
    %v1015 = vpop.f32.mrf.mxu0
    %v1016 = vadd.f32 %v1002, %v1015
    %1017 = vdwg.mxu0
    %1018 = vmatpush.bf16.msra.mxu0 %v656
    %1019 = vmatpush.bf16.msra.mxu0 %v648
    %1020 = vmatpush.bf16.msra.mxu0 %v640
    %1021 = vmatpush.bf16.msra.mxu0 %v632
    %1022 = vmatpush.bf16.msra.mxu0 %v624
    %1023 = vmatpush.bf16.msra.mxu0 %v616
    %1024 = vmatpush.bf16.msra.mxu0 %v608
    %1025 = vmatpush.bf16.msra.mxu0 %v600
    %1026 = vmatmul.bf16.gmra.mxu0 %v206
    %v1027 = vpop.f32.mrf.mxu0
    %v1028 = vadd.f32 0.0, %v1027
    %v1029 = vpop.f32.mrf.mxu0
    %v1030 = vadd.f32 0.0, %v1029
    %1031 = vdwg.mxu0
    %1032 = vmatpush.bf16.msra.mxu0 %v720
    %1033 = vmatpush.bf16.msra.mxu0 %v712
    %1034 = vmatpush.bf16.msra.mxu0 %v704
    %1035 = vmatpush.bf16.msra.mxu0 %v696
    %1036 = vmatpush.bf16.msra.mxu0 %v688
    %1037 = vmatpush.bf16.msra.mxu0 %v680
    %1038 = vmatpush.bf16.msra.mxu0 %v672
    %1039 = vmatpush.bf16.msra.mxu0 %v664
    %1040 = vmatmul.bf16.gmra.mxu0 %v207
    %v1041 = vpop.f32.mrf.mxu0
    %v1042 = vadd.f32 %v1028, %v1041
    %v1043 = vpop.f32.mrf.mxu0
    %v1044 = vadd.f32 %v1030, %v1043
    %1045 = vdwg.mxu0
    %1046 = vmatpush.bf16.msra.mxu0 %v657
    %1047 = vmatpush.bf16.msra.mxu0 %v649
    %1048 = vmatpush.bf16.msra.mxu0 %v641
    %1049 = vmatpush.bf16.msra.mxu0 %v633
    %1050 = vmatpush.bf16.msra.mxu0 %v625
    %1051 = vmatpush.bf16.msra.mxu0 %v617
    %1052 = vmatpush.bf16.msra.mxu0 %v609
    %1053 = vmatpush.bf16.msra.mxu0 %v601
    %1054 = vmatmul.bf16.gmra.mxu0 %v206
    %v1055 = vpop.f32.mrf.mxu0
    %v1056 = vadd.f32 0.0, %v1055
    %v1057 = vpop.f32.mrf.mxu0
    %v1058 = vadd.f32 0.0, %v1057
    %1059 = vdwg.mxu0
    %1060 = vmatpush.bf16.msra.mxu0 %v721
    %1061 = vmatpush.bf16.msra.mxu0 %v713
    %1062 = vmatpush.bf16.msra.mxu0 %v705
    %1063 = vmatpush.bf16.msra.mxu0 %v697
    %1064 = vmatpush.bf16.msra.mxu0 %v689
    %1065 = vmatpush.bf16.msra.mxu0 %v681
    %1066 = vmatpush.bf16.msra.mxu0 %v673
    %1067 = vmatpush.bf16.msra.mxu0 %v665
    %1068 = vmatmul.bf16.gmra.mxu0 %v207
    %v1069 = vpop.f32.mrf.mxu0
    %v1070 = vadd.f32 %v1056, %v1069
    %v1071 = vpop.f32.mrf.mxu0
    %v1072 = vadd.f32 %v1058, %v1071
    %1073 = vdwg.mxu0
    %v1074 = vmax.f32 %v874, %v930
    %v1075 = vmax.f32 %v902, %v958
    %v1076 = vmax.f32 %v876, %v932
    %v1077 = vmax.f32 %v904, %v960
    %v1078 = vmax.f32 %v986, %v1042
    %v1079 = vmax.f32 %v1014, %v1070
    %v1080 = vmax.f32 %v988, %v1044
    %v1081 = vmax.f32 %v1016, %v1072
    %v1082 = vmax.f32 %v1074, %v1078
    %v1083 = vmax.f32 %v1075, %v1079
    %v1084 = vmax.f32 %v1076, %v1080
    %v1085 = vmax.f32 %v1077, %v1081
    %v1086 = vld [vmem:[%s4] sm:$0x3]
    %v1088 = vperm.slane %v1086, 0
    %v1089 = vperm.slane %v1086, 1
    %v1092 = vadd.f32 %v1082, %v1088
    %v1093 = vadd.f32 %v1083, %v1089
    %v1094 = vadd.f32 %v1084, %v1088
    %v1095 = vadd.f32 %v1085, %v1089
    %v1096 = vmax.f32 %v1092, 0.0
    %v1097 = vmax.f32 %v1093, 0.0
    %v1098 = vmax.f32 %v1094, 0.0
    %v1099 = vmax.f32 %v1095, 0.0
    %v1100 = vpack.c.bf16 %v1098, %v1096
    %v1101 = vpack.c.bf16 %v1099, %v1097
    %v1102 = vld [vmem:[#allocation4] sm:$0xff]
    %v1103 = vld [vmem:[#allocation4 + $0x8] sm:$0xff]
    %v1104 = vld [vmem:[#allocation4 + $0x10] sm:$0xff]
    %v1105 = vld [vmem:[#allocation4 + $0x18] sm:$0xff]
    %v1106 = vld [vmem:[#allocation4 + $0x20] sm:$0xff]
    %v1107 = vld [vmem:[#allocation4 + $0x28] sm:$0xff]
    %v1108 = vld [vmem:[#allocation4 + $0x30] sm:$0xff]
    %v1109 = vld [vmem:[#allocation4 + $0x38] sm:$0xff]
    %v1110 = vld [vmem:[#allocation4 + $0x40] sm:$0xff]
    %v1111 = vld [vmem:[#allocation4 + $0x48] sm:$0xff]
    %v1112 = vld [vmem:[#allocation4 + $0x50] sm:$0xff]
    %v1113 = vld [vmem:[#allocation4 + $0x58] sm:$0xff]
    %v1114 = vld [vmem:[#allocation4 + $0x60] sm:$0xff]
    %v1115 = vld [vmem:[#allocation4 + $0x68] sm:$0xff]
    %v1116 = vld [vmem:[#allocation4 + $0x70] sm:$0xff]
    %v1117 = vld [vmem:[#allocation4 + $0x78] sm:$0xff]
    %v1118 = vld [vmem:[#allocation4 + $0x80] sm:$0xff]
    %v1119 = vld [vmem:[#allocation4 + $0x88] sm:$0xff]
    %v1120 = vld [vmem:[#allocation4 + $0x90] sm:$0xff]
    %v1121 = vld [vmem:[#allocation4 + $0x98] sm:$0xff]
    %v1122 = vld [vmem:[#allocation4 + $0xa0] sm:$0xff]
    %v1123 = vld [vmem:[#allocation4 + $0xa8] sm:$0xff]
    %v1124 = vld [vmem:[#allocation4 + $0xb0] sm:$0xff]
    %v1125 = vld [vmem:[#allocation4 + $0xb8] sm:$0xff]
    %v1126 = vld [vmem:[#allocation4 + $0xc0] sm:$0xff]
    %v1127 = vld [vmem:[#allocation4 + $0xc8] sm:$0xff]
    %v1128 = vld [vmem:[#allocation4 + $0xd0] sm:$0xff]
    %v1129 = vld [vmem:[#allocation4 + $0xd8] sm:$0xff]
    %v1130 = vld [vmem:[#allocation4 + $0xe0] sm:$0xff]
    %v1131 = vld [vmem:[#allocation4 + $0xe8] sm:$0xff]
    %v1132 = vld [vmem:[#allocation4 + $0xf0] sm:$0xff]
    %v1133 = vld [vmem:[#allocation4 + $0xf8] sm:$0xff]
    %v1134 = vld [vmem:[#allocation4 + $0x100] sm:$0xff]
    %v1135 = vld [vmem:[#allocation4 + $0x108] sm:$0xff]
    %v1136 = vld [vmem:[#allocation4 + $0x110] sm:$0xff]
    %v1137 = vld [vmem:[#allocation4 + $0x118] sm:$0xff]
    %v1138 = vld [vmem:[#allocation4 + $0x120] sm:$0xff]
    %v1139 = vld [vmem:[#allocation4 + $0x128] sm:$0xff]
    %v1140 = vld [vmem:[#allocation4 + $0x130] sm:$0xff]
    %v1141 = vld [vmem:[#allocation4 + $0x138] sm:$0xff]
    %v1142 = vld [vmem:[#allocation4 + $0x140] sm:$0xff]
    %v1143 = vld [vmem:[#allocation4 + $0x148] sm:$0xff]
    %v1144 = vld [vmem:[#allocation4 + $0x150] sm:$0xff]
    %v1145 = vld [vmem:[#allocation4 + $0x158] sm:$0xff]
    %v1146 = vld [vmem:[#allocation4 + $0x160] sm:$0xff]
    %v1147 = vld [vmem:[#allocation4 + $0x168] sm:$0xff]
    %v1148 = vld [vmem:[#allocation4 + $0x170] sm:$0xff]
    %v1149 = vld [vmem:[#allocation4 + $0x178] sm:$0xff]
    %v1150 = vld [vmem:[#allocation4 + $0x180] sm:$0xff]
    %v1151 = vld [vmem:[#allocation4 + $0x188] sm:$0xff]
    %v1152 = vld [vmem:[#allocation4 + $0x190] sm:$0xff]
    %v1153 = vld [vmem:[#allocation4 + $0x198] sm:$0xff]
    %v1154 = vld [vmem:[#allocation4 + $0x1a0] sm:$0xff]
    %v1155 = vld [vmem:[#allocation4 + $0x1a8] sm:$0xff]
    %v1156 = vld [vmem:[#allocation4 + $0x1b0] sm:$0xff]
    %v1157 = vld [vmem:[#allocation4 + $0x1b8] sm:$0xff]
    %v1158 = vld [vmem:[#allocation4 + $0x1c0] sm:$0xff]
    %v1159 = vld [vmem:[#allocation4 + $0x1c8] sm:$0xff]
    %v1160 = vld [vmem:[#allocation4 + $0x1d0] sm:$0xff]
    %v1161 = vld [vmem:[#allocation4 + $0x1d8] sm:$0xff]
    %v1162 = vld [vmem:[#allocation4 + $0x1e0] sm:$0xff]
    %v1163 = vld [vmem:[#allocation4 + $0x1e8] sm:$0xff]
    %v1164 = vld [vmem:[#allocation4 + $0x1f0] sm:$0xff]
    %v1165 = vld [vmem:[#allocation4 + $0x1f8] sm:$0xff]
    %v1230 = vunpack.c.l.b16 %v1102
    %v1231 = vunpack.c.h.b16 %v1102
    %v1232 = vunpack.c.l.b16 %v1103
    %v1233 = vunpack.c.h.b16 %v1103
    %v1234 = vunpack.c.l.b16 %v1104
    %v1235 = vunpack.c.h.b16 %v1104
    %v1236 = vunpack.c.l.b16 %v1105
    %v1237 = vunpack.c.h.b16 %v1105
    %v1238 = vunpack.c.l.b16 %v1106
    %v1239 = vunpack.c.h.b16 %v1106
    %v1240 = vunpack.c.l.b16 %v1107
    %v1241 = vunpack.c.h.b16 %v1107
    %v1242 = vunpack.c.l.b16 %v1108
    %v1243 = vunpack.c.h.b16 %v1108
    %v1244 = vunpack.c.l.b16 %v1109
    %v1245 = vunpack.c.h.b16 %v1109
    %v1246 = vunpack.c.l.b16 %v1110
    %v1247 = vunpack.c.h.b16 %v1110
    %v1248 = vunpack.c.l.b16 %v1111
    %v1249 = vunpack.c.h.b16 %v1111
    %v1250 = vunpack.c.l.b16 %v1112
    %v1251 = vunpack.c.h.b16 %v1112
    %v1252 = vunpack.c.l.b16 %v1113
    %v1253 = vunpack.c.h.b16 %v1113
    %v1254 = vunpack.c.l.b16 %v1114
    %v1255 = vunpack.c.h.b16 %v1114
    %v1256 = vunpack.c.l.b16 %v1115
    %v1257 = vunpack.c.h.b16 %v1115
    %v1258 = vunpack.c.l.b16 %v1116
    %v1259 = vunpack.c.h.b16 %v1116
    %v1260 = vunpack.c.l.b16 %v1117
    %v1261 = vunpack.c.h.b16 %v1117
    %v1262 = vunpack.c.l.b16 %v1118
    %v1263 = vunpack.c.h.b16 %v1118
    %v1264 = vunpack.c.l.b16 %v1119
    %v1265 = vunpack.c.h.b16 %v1119
    %v1266 = vunpack.c.l.b16 %v1120
    %v1267 = vunpack.c.h.b16 %v1120
    %v1268 = vunpack.c.l.b16 %v1121
    %v1269 = vunpack.c.h.b16 %v1121
    %v1270 = vunpack.c.l.b16 %v1122
    %v1271 = vunpack.c.h.b16 %v1122
    %v1272 = vunpack.c.l.b16 %v1123
    %v1273 = vunpack.c.h.b16 %v1123
    %v1274 = vunpack.c.l.b16 %v1124
    %v1275 = vunpack.c.h.b16 %v1124
    %v1276 = vunpack.c.l.b16 %v1125
    %v1277 = vunpack.c.h.b16 %v1125
    %v1278 = vunpack.c.l.b16 %v1126
    %v1279 = vunpack.c.h.b16 %v1126
    %v1280 = vunpack.c.l.b16 %v1127
    %v1281 = vunpack.c.h.b16 %v1127
    %v1282 = vunpack.c.l.b16 %v1128
    %v1283 = vunpack.c.h.b16 %v1128
    %v1284 = vunpack.c.l.b16 %v1129
    %v1285 = vunpack.c.h.b16 %v1129
    %v1286 = vunpack.c.l.b16 %v1130
    %v1287 = vunpack.c.h.b16 %v1130
    %v1288 = vunpack.c.l.b16 %v1131
    %v1289 = vunpack.c.h.b16 %v1131
    %v1290 = vunpack.c.l.b16 %v1132
    %v1291 = vunpack.c.h.b16 %v1132
    %v1292 = vunpack.c.l.b16 %v1133
    %v1293 = vunpack.c.h.b16 %v1133
    %v1294 = vunpack.c.l.b16 %v1134
    %v1295 = vunpack.c.h.b16 %v1134
    %v1296 = vunpack.c.l.b16 %v1135
    %v1297 = vunpack.c.h.b16 %v1135
    %v1298 = vunpack.c.l.b16 %v1136
    %v1299 = vunpack.c.h.b16 %v1136
    %v1300 = vunpack.c.l.b16 %v1137
    %v1301 = vunpack.c.h.b16 %v1137
    %v1302 = vunpack.c.l.b16 %v1138
    %v1303 = vunpack.c.h.b16 %v1138
    %v1304 = vunpack.c.l.b16 %v1139
    %v1305 = vunpack.c.h.b16 %v1139
    %v1306 = vunpack.c.l.b16 %v1140
    %v1307 = vunpack.c.h.b16 %v1140
    %v1308 = vunpack.c.l.b16 %v1141
    %v1309 = vunpack.c.h.b16 %v1141
    %v1310 = vunpack.c.l.b16 %v1142
    %v1311 = vunpack.c.h.b16 %v1142
    %v1312 = vunpack.c.l.b16 %v1143
    %v1313 = vunpack.c.h.b16 %v1143
    %v1314 = vunpack.c.l.b16 %v1144
    %v1315 = vunpack.c.h.b16 %v1144
    %v1316 = vunpack.c.l.b16 %v1145
    %v1317 = vunpack.c.h.b16 %v1145
    %v1318 = vunpack.c.l.b16 %v1146
    %v1319 = vunpack.c.h.b16 %v1146
    %v1320 = vunpack.c.l.b16 %v1147
    %v1321 = vunpack.c.h.b16 %v1147
    %v1322 = vunpack.c.l.b16 %v1148
    %v1323 = vunpack.c.h.b16 %v1148
    %v1324 = vunpack.c.l.b16 %v1149
    %v1325 = vunpack.c.h.b16 %v1149
    %v1326 = vunpack.c.l.b16 %v1150
    %v1327 = vunpack.c.h.b16 %v1150
    %v1328 = vunpack.c.l.b16 %v1151
    %v1329 = vunpack.c.h.b16 %v1151
    %v1330 = vunpack.c.l.b16 %v1152
    %v1331 = vunpack.c.h.b16 %v1152
    %v1332 = vunpack.c.l.b16 %v1153
    %v1333 = vunpack.c.h.b16 %v1153
    %v1334 = vunpack.c.l.b16 %v1154
    %v1335 = vunpack.c.h.b16 %v1154
    %v1336 = vunpack.c.l.b16 %v1155
    %v1337 = vunpack.c.h.b16 %v1155
    %v1338 = vunpack.c.l.b16 %v1156
    %v1339 = vunpack.c.h.b16 %v1156
    %v1340 = vunpack.c.l.b16 %v1157
    %v1341 = vunpack.c.h.b16 %v1157
    %v1342 = vunpack.c.l.b16 %v1158
    %v1343 = vunpack.c.h.b16 %v1158
    %v1344 = vunpack.c.l.b16 %v1159
    %v1345 = vunpack.c.h.b16 %v1159
    %v1346 = vunpack.c.l.b16 %v1160
    %v1347 = vunpack.c.h.b16 %v1160
    %v1348 = vunpack.c.l.b16 %v1161
    %v1349 = vunpack.c.h.b16 %v1161
    %v1350 = vunpack.c.l.b16 %v1162
    %v1351 = vunpack.c.h.b16 %v1162
    %v1352 = vunpack.c.l.b16 %v1163
    %v1353 = vunpack.c.h.b16 %v1163
    %v1354 = vunpack.c.l.b16 %v1164
    %v1355 = vunpack.c.h.b16 %v1164
    %v1356 = vunpack.c.l.b16 %v1165
    %v1357 = vunpack.c.h.b16 %v1165
    %v1358 = vpack.c.b16 %v1234, %v1230
    %v1359 = vpack.c.b16 %v1235, %v1231
    %v1360 = vpack.c.b16 %v1236, %v1232
    %v1361 = vpack.c.b16 %v1237, %v1233
    %v1362 = vpack.c.b16 %v1242, %v1238
    %v1363 = vpack.c.b16 %v1243, %v1239
    %v1364 = vpack.c.b16 %v1244, %v1240
    %v1365 = vpack.c.b16 %v1245, %v1241
    %v1366 = vpack.c.b16 %v1250, %v1246
    %v1367 = vpack.c.b16 %v1251, %v1247
    %v1368 = vpack.c.b16 %v1252, %v1248
    %v1369 = vpack.c.b16 %v1253, %v1249
    %v1370 = vpack.c.b16 %v1258, %v1254
    %v1371 = vpack.c.b16 %v1259, %v1255
    %v1372 = vpack.c.b16 %v1260, %v1256
    %v1373 = vpack.c.b16 %v1261, %v1257
    %v1374 = vpack.c.b16 %v1266, %v1262
    %v1375 = vpack.c.b16 %v1267, %v1263
    %v1376 = vpack.c.b16 %v1268, %v1264
    %v1377 = vpack.c.b16 %v1269, %v1265
    %v1378 = vpack.c.b16 %v1274, %v1270
    %v1379 = vpack.c.b16 %v1275, %v1271
    %v1380 = vpack.c.b16 %v1276, %v1272
    %v1381 = vpack.c.b16 %v1277, %v1273
    %v1382 = vpack.c.b16 %v1282, %v1278
    %v1383 = vpack.c.b16 %v1283, %v1279
    %v1384 = vpack.c.b16 %v1284, %v1280
    %v1385 = vpack.c.b16 %v1285, %v1281
    %v1386 = vpack.c.b16 %v1290, %v1286
    %v1387 = vpack.c.b16 %v1291, %v1287
    %v1388 = vpack.c.b16 %v1292, %v1288
    %v1389 = vpack.c.b16 %v1293, %v1289
    %v1390 = vpack.c.b16 %v1298, %v1294
    %v1391 = vpack.c.b16 %v1299, %v1295
    %v1392 = vpack.c.b16 %v1300, %v1296
    %v1393 = vpack.c.b16 %v1301, %v1297
    %v1394 = vpack.c.b16 %v1306, %v1302
    %v1395 = vpack.c.b16 %v1307, %v1303
    %v1396 = vpack.c.b16 %v1308, %v1304
    %v1397 = vpack.c.b16 %v1309, %v1305
    %v1398 = vpack.c.b16 %v1314, %v1310
    %v1399 = vpack.c.b16 %v1315, %v1311
    %v1400 = vpack.c.b16 %v1316, %v1312
    %v1401 = vpack.c.b16 %v1317, %v1313
    %v1402 = vpack.c.b16 %v1322, %v1318
    %v1403 = vpack.c.b16 %v1323, %v1319
    %v1404 = vpack.c.b16 %v1324, %v1320
    %v1405 = vpack.c.b16 %v1325, %v1321
    %v1406 = vpack.c.b16 %v1330, %v1326
    %v1407 = vpack.c.b16 %v1331, %v1327
    %v1408 = vpack.c.b16 %v1332, %v1328
    %v1409 = vpack.c.b16 %v1333, %v1329
    %v1410 = vpack.c.b16 %v1338, %v1334
    %v1411 = vpack.c.b16 %v1339, %v1335
    %v1412 = vpack.c.b16 %v1340, %v1336
    %v1413 = vpack.c.b16 %v1341, %v1337
    %v1414 = vpack.c.b16 %v1346, %v1342
    %v1415 = vpack.c.b16 %v1347, %v1343
    %v1416 = vpack.c.b16 %v1348, %v1344
    %v1417 = vpack.c.b16 %v1349, %v1345
    %v1418 = vpack.c.b16 %v1354, %v1350
    %v1419 = vpack.c.b16 %v1355, %v1351
    %v1420 = vpack.c.b16 %v1356, %v1352
    %v1421 = vpack.c.b16 %v1357, %v1353
    %1486 = vmatpush.bf16.msra.mxu0 %v1386
    %1487 = vmatpush.bf16.msra.mxu0 %v1382
    %1488 = vmatpush.bf16.msra.mxu0 %v1378
    %1489 = vmatpush.bf16.msra.mxu0 %v1374
    %1490 = vmatpush.bf16.msra.mxu0 %v1370
    %1491 = vmatpush.bf16.msra.mxu0 %v1366
    %1492 = vmatpush.bf16.msra.mxu0 %v1362
    %1493 = vmatpush.bf16.msra.mxu0 %v1358
    %1494 = vmatmul.bf16.gmra.mxu0 %v1100
    %v1495 = vpop.f32.mrf.mxu0
    %v1496 = vadd.f32 0.0, %v1495
    %v1497 = vpop.f32.mrf.mxu0
    %v1498 = vadd.f32 0.0, %v1497
    %1499 = vdwg.mxu0
    %1500 = vmatpush.bf16.msra.mxu0 %v1418
    %1501 = vmatpush.bf16.msra.mxu0 %v1414
    %1502 = vmatpush.bf16.msra.mxu0 %v1410
    %1503 = vmatpush.bf16.msra.mxu0 %v1406
    %1504 = vmatpush.bf16.msra.mxu0 %v1402
    %1505 = vmatpush.bf16.msra.mxu0 %v1398
    %1506 = vmatpush.bf16.msra.mxu0 %v1394
    %1507 = vmatpush.bf16.msra.mxu0 %v1390
    %1508 = vmatmul.bf16.gmra.mxu0 %v1101
    %v1509 = vpop.f32.mrf.mxu0
    %v1510 = vadd.f32 %v1496, %v1509
    %v1511 = vpop.f32.mrf.mxu0
    %v1512 = vadd.f32 %v1498, %v1511
    %1513 = vdwg.mxu0
    %1514 = vmatpush.bf16.msra.mxu0 %v1387
    %1515 = vmatpush.bf16.msra.mxu0 %v1383
    %1516 = vmatpush.bf16.msra.mxu0 %v1379
    %1517 = vmatpush.bf16.msra.mxu0 %v1375
    %1518 = vmatpush.bf16.msra.mxu0 %v1371
    %1519 = vmatpush.bf16.msra.mxu0 %v1367
    %1520 = vmatpush.bf16.msra.mxu0 %v1363
    %1521 = vmatpush.bf16.msra.mxu0 %v1359
    %1522 = vmatmul.bf16.gmra.mxu0 %v1100
    %v1523 = vpop.f32.mrf.mxu0
    %v1524 = vadd.f32 0.0, %v1523
    %v1525 = vpop.f32.mrf.mxu0
    %v1526 = vadd.f32 0.0, %v1525
    %1527 = vdwg.mxu0
    %1528 = vmatpush.bf16.msra.mxu0 %v1419
    %1529 = vmatpush.bf16.msra.mxu0 %v1415
    %1530 = vmatpush.bf16.msra.mxu0 %v1411
    %1531 = vmatpush.bf16.msra.mxu0 %v1407
    %1532 = vmatpush.bf16.msra.mxu0 %v1403
    %1533 = vmatpush.bf16.msra.mxu0 %v1399
    %1534 = vmatpush.bf16.msra.mxu0 %v1395
    %1535 = vmatpush.bf16.msra.mxu0 %v1391
    %1536 = vmatmul.bf16.gmra.mxu0 %v1101
    %v1537 = vpop.f32.mrf.mxu0
    %v1538 = vadd.f32 %v1524, %v1537
    %v1539 = vpop.f32.mrf.mxu0
    %v1540 = vadd.f32 %v1526, %v1539
    %1541 = vdwg.mxu0
    %1542 = vmatpush.bf16.msra.mxu0 %v1388
    %1543 = vmatpush.bf16.msra.mxu0 %v1384
    %1544 = vmatpush.bf16.msra.mxu0 %v1380
    %1545 = vmatpush.bf16.msra.mxu0 %v1376
    %1546 = vmatpush.bf16.msra.mxu0 %v1372
    %1547 = vmatpush.bf16.msra.mxu0 %v1368
    %1548 = vmatpush.bf16.msra.mxu0 %v1364
    %1549 = vmatpush.bf16.msra.mxu0 %v1360
    %1550 = vmatmul.bf16.gmra.mxu0 %v1100
    %v1551 = vpop.f32.mrf.mxu0
    %v1552 = vadd.f32 0.0, %v1551
    %v1553 = vpop.f32.mrf.mxu0
    %v1554 = vadd.f32 0.0, %v1553
    %1555 = vdwg.mxu0
    %1556 = vmatpush.bf16.msra.mxu0 %v1420
    %1557 = vmatpush.bf16.msra.mxu0 %v1416
    %1558 = vmatpush.bf16.msra.mxu0 %v1412
    %1559 = vmatpush.bf16.msra.mxu0 %v1408
    %1560 = vmatpush.bf16.msra.mxu0 %v1404
    %1561 = vmatpush.bf16.msra.mxu0 %v1400
    %1562 = vmatpush.bf16.msra.mxu0 %v1396
    %1563 = vmatpush.bf16.msra.mxu0 %v1392
    %1564 = vmatmul.bf16.gmra.mxu0 %v1101
    %v1565 = vpop.f32.mrf.mxu0
    %v1566 = vadd.f32 %v1552, %v1565
    %v1567 = vpop.f32.mrf.mxu0
    %v1568 = vadd.f32 %v1554, %v1567
    %1569 = vdwg.mxu0
    %1570 = vmatpush.bf16.msra.mxu0 %v1389
    %1571 = vmatpush.bf16.msra.mxu0 %v1385
    %1572 = vmatpush.bf16.msra.mxu0 %v1381
    %1573 = vmatpush.bf16.msra.mxu0 %v1377
    %1574 = vmatpush.bf16.msra.mxu0 %v1373
    %1575 = vmatpush.bf16.msra.mxu0 %v1369
    %1576 = vmatpush.bf16.msra.mxu0 %v1365
    %1577 = vmatpush.bf16.msra.mxu0 %v1361
    %1578 = vmatmul.bf16.gmra.mxu0 %v1100
    %v1579 = vpop.f32.mrf.mxu0
    %v1580 = vadd.f32 0.0, %v1579
    %v1581 = vpop.f32.mrf.mxu0
    %v1582 = vadd.f32 0.0, %v1581
    %1583 = vdwg.mxu0
    %1584 = vmatpush.bf16.msra.mxu0 %v1421
    %1585 = vmatpush.bf16.msra.mxu0 %v1417
    %1586 = vmatpush.bf16.msra.mxu0 %v1413
    %1587 = vmatpush.bf16.msra.mxu0 %v1409
    %1588 = vmatpush.bf16.msra.mxu0 %v1405
    %1589 = vmatpush.bf16.msra.mxu0 %v1401
    %1590 = vmatpush.bf16.msra.mxu0 %v1397
    %1591 = vmatpush.bf16.msra.mxu0 %v1393
    %1592 = vmatmul.bf16.gmra.mxu0 %v1101
    %v1593 = vpop.f32.mrf.mxu0
    %v1594 = vadd.f32 %v1580, %v1593
    %v1595 = vpop.f32.mrf.mxu0
    %v1596 = vadd.f32 %v1582, %v1595
    %1597 = vdwg.mxu0
    %v1598 = vmax.f32 %v1510, %v1538
    %v1599 = vmax.f32 %v1512, %v1540
    %v1600 = vmax.f32 %v1566, %v1594
    %v1601 = vmax.f32 %v1568, %v1596
    %v1602 = vmax.f32 %v1598, %v1600
    %v1603 = vmax.f32 %v1599, %v1601
    %v1604 = vld [vmem:[%s5] sm:$0x1]
    %v1605 = vperm.slane %v1604, 0
    %v1606 = vadd.f32 %v1602, %v1605
    %v1607 = vadd.f32 %v1603, %v1605
    %v1608 = vmax.f32 %v1606, 0.0
    %v1609 = vmax.f32 %v1607, 0.0
    %v1610 = vpack.c.bf16 %v1609, %v1608
    %v1611 = vld [vmem:[#allocation6] sm:$0xf]
    %v1612 = vld [vmem:[#allocation6 + $0x4] sm:$0xf]
    %v1613 = vld [vmem:[#allocation6 + $0x8] sm:$0xf]
    %v1614 = vld [vmem:[#allocation6 + $0xc] sm:$0xf]
    %v1615 = vld [vmem:[#allocation6 + $0x10] sm:$0xf]
    %v1616 = vld [vmem:[#allocation6 + $0x14] sm:$0xf]
    %v1617 = vld [vmem:[#allocation6 + $0x18] sm:$0xf]
    %v1618 = vld [vmem:[#allocation6 + $0x1c] sm:$0xf]
    %v1619 = vld [vmem:[#allocation6 + $0x20] sm:$0xf]
    %v1620 = vld [vmem:[#allocation6 + $0x24] sm:$0xf]
    %v1621 = vld [vmem:[#allocation6 + $0x28] sm:$0xf]
    %v1622 = vld [vmem:[#allocation6 + $0x2c] sm:$0xf]
    %v1623 = vld [vmem:[#allocation6 + $0x30] sm:$0xf]
    %v1624 = vld [vmem:[#allocation6 + $0x34] sm:$0xf]
    %v1625 = vld [vmem:[#allocation6 + $0x38] sm:$0xf]
    %v1626 = vld [vmem:[#allocation6 + $0x3c] sm:$0xf]
    %v1627 = vld [vmem:[%s5 + $0x1] sm:$0x1]
    %v1628 = vperm.slane %v1627, 0
    %v1645 = vunpack.c.l.b16 %v1611
    %v1646 = vunpack.c.l.b16 %v1612
    %v1647 = vunpack.c.l.b16 %v1613
    %v1648 = vunpack.c.l.b16 %v1614
    %v1649 = vunpack.c.l.b16 %v1615
    %v1650 = vunpack.c.l.b16 %v1616
    %v1651 = vunpack.c.l.b16 %v1617
    %v1652 = vunpack.c.l.b16 %v1618
    %v1653 = vunpack.c.l.b16 %v1619
    %v1654 = vunpack.c.l.b16 %v1620
    %v1655 = vunpack.c.l.b16 %v1621
    %v1656 = vunpack.c.l.b16 %v1622
    %v1657 = vunpack.c.l.b16 %v1623
    %v1658 = vunpack.c.l.b16 %v1624
    %v1659 = vunpack.c.l.b16 %v1625
    %v1660 = vunpack.c.l.b16 %v1626
    %v1661 = vpack.c.b16 %v1646, %v1645
    %v1662 = vpack.c.b16 %v1648, %v1647
    %v1663 = vpack.c.b16 %v1650, %v1649
    %v1664 = vpack.c.b16 %v1652, %v1651
    %v1665 = vpack.c.b16 %v1654, %v1653
    %v1666 = vpack.c.b16 %v1656, %v1655
    %v1667 = vpack.c.b16 %v1658, %v1657
    %v1668 = vpack.c.b16 %v1660, %v1659
    %1677 = vmatpush.bf16.msra.mxu0 %v1668
    %1678 = vmatpush.bf16.msra.mxu0 %v1667
    %1679 = vmatpush.bf16.msra.mxu0 %v1666
    %1680 = vmatpush.bf16.msra.mxu0 %v1665
    %1681 = vmatpush.bf16.msra.mxu0 %v1664
    %1682 = vmatpush.bf16.msra.mxu0 %v1663
    %1683 = vmatpush.bf16.msra.mxu0 %v1662
    %1684 = vmatpush.bf16.msra.mxu0 %v1661
    %1685 = vmatmul.bf16.gmra.mxu0 %v1610
    %v1686 = vpop.f32.mrf.mxu0
    %v1687 = vadd.f32 %v1628, %v1686
    %v1688 = vpop.f32.mrf.mxu0
    %v1689 = vadd.f32 %v1628, %v1688
    %1690 = vdwg.mxu0
    %v1691 = vmax.f32 %v1687, 0.0
    %v1692 = vmax.f32 %v1689, 0.0
    %v1693 = vpack.c.bf16 %v1692, %v1691
    %s1694 = scalar_lea.vmem [#allocation6], 64
    %v1695 = vld [vmem:[%s1694] sm:$0xf]
    %v1696 = vld [vmem:[%s1694 + $0x4] sm:$0xf]
    %v1697 = vld [vmem:[%s1694 + $0x8] sm:$0xf]
    %v1698 = vld [vmem:[%s1694 + $0xc] sm:$0xf]
    %v1699 = vld [vmem:[%s1694 + $0x10] sm:$0xf]
    %v1700 = vld [vmem:[%s1694 + $0x14] sm:$0xf]
    %v1701 = vld [vmem:[%s1694 + $0x18] sm:$0xf]
    %v1702 = vld [vmem:[%s1694 + $0x1c] sm:$0xf]
    %v1703 = vld [vmem:[%s1694 + $0x20] sm:$0xf]
    %v1704 = vld [vmem:[%s1694 + $0x24] sm:$0xf]
    %v1705 = vld [vmem:[%s1694 + $0x28] sm:$0xf]
    %v1706 = vld [vmem:[%s1694 + $0x2c] sm:$0xf]
    %v1707 = vld [vmem:[%s1694 + $0x30] sm:$0xf]
    %v1708 = vld [vmem:[%s1694 + $0x34] sm:$0xf]
    %v1709 = vld [vmem:[%s1694 + $0x38] sm:$0xf]
    %v1710 = vld [vmem:[%s1694 + $0x3c] sm:$0xf]
    %v1711 = vld [vmem:[%s5 + $0x2] sm:$0x1]
    %v1712 = vperm.slane %v1711, 0
    %v1729 = vunpack.c.l.b16 %v1695
    %v1730 = vunpack.c.l.b16 %v1696
    %v1731 = vunpack.c.l.b16 %v1697
    %v1732 = vunpack.c.l.b16 %v1698
    %v1733 = vunpack.c.l.b16 %v1699
    %v1734 = vunpack.c.l.b16 %v1700
    %v1735 = vunpack.c.l.b16 %v1701
    %v1736 = vunpack.c.l.b16 %v1702
    %v1737 = vunpack.c.l.b16 %v1703
    %v1738 = vunpack.c.l.b16 %v1704
    %v1739 = vunpack.c.l.b16 %v1705
    %v1740 = vunpack.c.l.b16 %v1706
    %v1741 = vunpack.c.l.b16 %v1707
    %v1742 = vunpack.c.l.b16 %v1708
    %v1743 = vunpack.c.l.b16 %v1709
    %v1744 = vunpack.c.l.b16 %v1710
    %v1745 = vpack.c.b16 %v1730, %v1729
    %v1746 = vpack.c.b16 %v1732, %v1731
    %v1747 = vpack.c.b16 %v1734, %v1733
    %v1748 = vpack.c.b16 %v1736, %v1735
    %v1749 = vpack.c.b16 %v1738, %v1737
    %v1750 = vpack.c.b16 %v1740, %v1739
    %v1751 = vpack.c.b16 %v1742, %v1741
    %v1752 = vpack.c.b16 %v1744, %v1743
    %1761 = vmatpush.bf16.msra.mxu0 %v1752
    %1762 = vmatpush.bf16.msra.mxu0 %v1751
    %1763 = vmatpush.bf16.msra.mxu0 %v1750
    %1764 = vmatpush.bf16.msra.mxu0 %v1749
    %1765 = vmatpush.bf16.msra.mxu0 %v1748
    %1766 = vmatpush.bf16.msra.mxu0 %v1747
    %1767 = vmatpush.bf16.msra.mxu0 %v1746
    %1768 = vmatpush.bf16.msra.mxu0 %v1745
    %1769 = vmatmul.bf16.gmra.mxu0 %v1693
    %v1770 = vpop.f32.mrf.mxu0
    %v1771 = vadd.f32 %v1712, %v1770
    %v1772 = vpop.f32.mrf.mxu0
    %v1773 = vadd.f32 %v1712, %v1772
    %1774 = vdwg.mxu0
    %v1775 = vmax.f32 %v1771, 0.0
    %v1776 = vmax.f32 %v1773, 0.0
    %v1777 = vpack.c.bf16 %v1776, %v1775
    %s1778 = scalar_lea.vmem [#allocation6], 128
    %v1779 = vld [vmem:[%s1778] sm:$0xf]
    %v1780 = vld [vmem:[%s1778 + $0x4] sm:$0xf]
    %v1781 = vld [vmem:[%s1778 + $0x8] sm:$0xf]
    %v1782 = vld [vmem:[%s1778 + $0xc] sm:$0xf]
    %v1783 = vld [vmem:[%s1778 + $0x10] sm:$0xf]
    %v1784 = vld [vmem:[%s1778 + $0x14] sm:$0xf]
    %v1785 = vld [vmem:[%s1778 + $0x18] sm:$0xf]
    %v1786 = vld [vmem:[%s1778 + $0x1c] sm:$0xf]
    %v1787 = vld [vmem:[%s1778 + $0x20] sm:$0xf]
    %v1788 = vld [vmem:[%s1778 + $0x24] sm:$0xf]
    %v1789 = vld [vmem:[%s1778 + $0x28] sm:$0xf]
    %v1790 = vld [vmem:[%s1778 + $0x2c] sm:$0xf]
    %v1791 = vld [vmem:[%s1778 + $0x30] sm:$0xf]
    %v1792 = vld [vmem:[%s1778 + $0x34] sm:$0xf]
    %v1793 = vld [vmem:[%s1778 + $0x38] sm:$0xf]
    %v1794 = vld [vmem:[%s1778 + $0x3c] sm:$0xf]
    %v1795 = vld [vmem:[%s5 + $0x3] sm:$0x1]
    %v1796 = vperm.slane %v1795, 0
    %v1813 = vunpack.c.l.b16 %v1779
    %v1814 = vunpack.c.l.b16 %v1780
    %v1815 = vunpack.c.l.b16 %v1781
    %v1816 = vunpack.c.l.b16 %v1782
    %v1817 = vunpack.c.l.b16 %v1783
    %v1818 = vunpack.c.l.b16 %v1784
    %v1819 = vunpack.c.l.b16 %v1785
    %v1820 = vunpack.c.l.b16 %v1786
    %v1821 = vunpack.c.l.b16 %v1787
    %v1822 = vunpack.c.l.b16 %v1788
    %v1823 = vunpack.c.l.b16 %v1789
    %v1824 = vunpack.c.l.b16 %v1790
    %v1825 = vunpack.c.l.b16 %v1791
    %v1826 = vunpack.c.l.b16 %v1792
    %v1827 = vunpack.c.l.b16 %v1793
    %v1828 = vunpack.c.l.b16 %v1794
    %v1829 = vpack.c.b16 %v1814, %v1813
    %v1830 = vpack.c.b16 %v1816, %v1815
    %v1831 = vpack.c.b16 %v1818, %v1817
    %v1832 = vpack.c.b16 %v1820, %v1819
    %v1833 = vpack.c.b16 %v1822, %v1821
    %v1834 = vpack.c.b16 %v1824, %v1823
    %v1835 = vpack.c.b16 %v1826, %v1825
    %v1836 = vpack.c.b16 %v1828, %v1827
    %1845 = vmatpush.bf16.msra.mxu0 %v1836
    %1846 = vmatpush.bf16.msra.mxu0 %v1835
    %1847 = vmatpush.bf16.msra.mxu0 %v1834
    %1848 = vmatpush.bf16.msra.mxu0 %v1833
    %1849 = vmatpush.bf16.msra.mxu0 %v1832
    %1850 = vmatpush.bf16.msra.mxu0 %v1831
    %1851 = vmatpush.bf16.msra.mxu0 %v1830
    %1852 = vmatpush.bf16.msra.mxu0 %v1829
    %1853 = vmatmul.bf16.gmra.mxu0 %v1777
    %v1854 = vpop.f32.mrf.mxu0
    %v1855 = vadd.f32 %v1796, %v1854
    %v1856 = vpop.f32.mrf.mxu0
    %v1857 = vadd.f32 %v1796, %v1856
    %1858 = vdwg.mxu0
    %1859 = vst [vmem:[%s6] sm:$0xff] %v1855
    %1860 = vst [vmem:[%s6 + $0x8] sm:$0xff] %v1857
    // Predicated region
    $region38: #{net_forward.1} parent=1 // pred_check
      _
    $region39: #{net_forward.1} parent=1 // pred_check_branch
      %1862 = sbr.rel (0) target = $region41
    $region40: #{net_forward.1} parent=1 // pred_region
      _
    $region41: #{net_forward.1} parent=1 // pred_fallthru
      _
    // Predicated region
    $region42: #{net_forward.1} parent=1 // pred_check
      _
    $region43: #{net_forward.1} parent=1 // pred_check_branch
      %1864 = sbr.rel (0) target = $region45
    $region44: #{net_forward.1} parent=1 // pred_region
      _
    $region45: #{net_forward.1} parent=1 // pred_fallthru
      _
    %1865 = vsyncpa [#allocation3], 1
    %1866 = vsyncpa [#allocation5], 1

</llo_original>
